<compile_context>
chip_gen: v5e
topology: v5e:2x2
jax: 0.10.0
libtpu: 0.0.40
codegen_flags: <defaults>
</compile_context>

<pallas_src>
import functools

import jax
import jax.numpy as jnp
from jax.experimental import pallas as pl
from jax.experimental.pallas import tpu as pltpu

# Set to jnp.bfloat16 for ~2x MXU throughput and half the activation DMA
# bytes (accumulation stays f32 via preferred_element_type).  Kept f32 by
# default to preserve the PyTorch module's numerics exactly (the perf review
# flags bf16 as a deliberate precision trade-off).
_MXU_DTYPE = jnp.float32

# TODO(synk): only the default-arg ('innermost') UnetBlock path is
# implemented; the other layerPos branches require an external
# `middle_unet_block` submodule instance and are out of scope here.


# ----------------------------- fused Pallas kernel --------------------------

def _unet_inner_kernel(xph_ref, wdt_ref, bd_ref, wut_ref, bu_ref,
                       o_ref, midp_ref, *, Ho, Wo, Cin, Cmid, Cout):
    """Fused down-conv -> ReLU -> ConvTranspose -> InstanceNorm -> ReLU for
    ONE image.

    xph_ref : (Ho+1, Wo+1, 4*Cin)  reflect-padded input, split into the 4
              (row, col)-parity phases, concatenated on channels.
    wdt_ref : (4, 4*Cin, Cmid)     down-conv weights, one GEMM matrix per
              2x2 tap (dy, dx).
    wut_ref : (16, Cmid, Cout)     up-conv weights, one matrix per
              (output phase, 2x2 tap).
    o_ref   : (4*Ho*Wo, Cout)      the 4 output phases stacked on rows.
    midp_ref: (Ho+2, Wo+2, Cmid)   VMEM scratch holding zero-padded `mid`.
    """
    f32 = jnp.float32
    npix = Ho * Wo

    # ---- down conv: Conv2d(k=4, s=2, p=1 reflect) as 4 phase-tap GEMMs -----
    acc = jnp.zeros((npix, Cmid), f32)
    for dy in range(2):
        for dx in range(2):
            tap = xph_ref[dy:dy + Ho, dx:dx + Wo, :].reshape(npix, 4 * Cin)
            acc = acc + jnp.dot(tap, wdt_ref[dy * 2 + dx],
                                preferred_element_type=f32)
    mid = jnp.maximum(acc + bd_ref[...], 0.0)                       # ReLU

    # ---- stage zero-padded `mid` in VMEM (ConvT padding) --------------------
    midp_ref[...] = jnp.zeros(midp_ref.shape, midp_ref.dtype)
    midp_ref[1:Ho + 1, 1:Wo + 1, :] = (
        mid.reshape(Ho, Wo, Cmid).astype(midp_ref.dtype))

    # ---- up conv: ConvTranspose2d(k=4, s=2, p=1), phase-decomposed ----------
    phases = []
    ssum = jnp.zeros((1, Cout), f32)
    for a in range(2):
        for b in range(2):
            acc2 = jnp.zeros((npix, Cout), f32)
            for dy in range(2):
                for dx in range(2):
                    tap = midp_ref[a + dy:a + dy + Ho,
                                   b + dx:b + dx + Wo, :].reshape(npix, Cmid)
                    acc2 = acc2 + jnp.dot(
                        tap, wut_ref[(a * 2 + b) * 4 + dy * 2 + dx],
                        preferred_element_type=f32)
            yph = acc2 + bu_ref[...]
            ssum = ssum + jnp.sum(yph, axis=0, keepdims=True)
            phases.append(yph)

    # ---- InstanceNorm2d (biased var, eps=1e-5, affine=False) + ReLU ---------
    n = float(4 * npix)
    mean = ssum / n
    vsum = jnp.zeros((1, Cout), f32)
    for yph in phases:
        d = yph - mean
        vsum = vsum + jnp.sum(d * d, axis=0, keepdims=True)
    inv = jax.lax.rsqrt(vsum / n + 1e-5)
    for ph, yph in enumerate(phases):
        o_ref[ph * npix:(ph + 1) * npix, :] = (
            jnp.maximum((yph - mean) * inv, 0.0).astype(o_ref.dtype))


# ------------------------------ wrapper --------------------------------------

def unet_block_innermost(x, params):
    """Forward pass of UnetBlock(layerPos='innermost').  x: NCHW float32."""
    w_down, b_down, w_up, b_up = params
    B, Cin, H, W = x.shape
    Cmid = w_down.shape[0]          # inner_depth
    Cout = w_up.shape[1]            # out_depth (ConvT weight: (Cin_t, Cout, k, k))
    assert H % 2 == 0 and W % 2 == 0, "k=4, s=2, p=1 needs even H, W"
    Ho, Wo = H // 2, W // 2
    npix = Ho * Wo

    # --- entry boundary: reflect pad, NCHW->NHWC, stride-2 phase split ------
    xp = jnp.pad(x, ((0, 0), (0, 0), (1, 1), (1, 1)), mode="reflect")
    xp = jnp.transpose(xp, (0, 2, 3, 1))                   # (B, H+2, W+2, Cin)
    # channel index = (p*2 + q)*Cin + ci, (p, q) = (row, col) parity
    xph = jnp.concatenate(
        [xp[:, p::2, q::2, :] for p in range(2) for q in range(2)],
        axis=-1).astype(_MXU_DTYPE)                        # (B, Ho+1, Wo+1, 4*Cin)

    # --- down-conv weights: one (4*Cin, Cmid) matrix per 2x2 tap (dy, dx) ---
    # wdt[dy*2+dx, (p*2+q)*Cin + ci, co] = w_down[co, ci, 2*dy+p, 2*dx+q]
    wdt = w_down.reshape(Cmid, Cin, 2, 2, 2, 2)            # (co, ci, dy, p, dx, q)
    wdt = jnp.transpose(wdt, (2, 4, 3, 5, 1, 0))           # (dy, dx, p, q, ci, co)
    wdt = wdt.reshape(4, 4 * Cin, Cmid).astype(_MXU_DTYPE)

    # --- up-conv (ConvTranspose) phase/tap weights ---------------------------
    # wut[(a*2+b)*4 + dy*2+dx, ci, co] = w_up[ci, co, 3-a-2*dy, 3-b-2*dx]
    wut = jnp.stack(
        [w_up[:, :, 3 - a - 2 * dy, 3 - b - 2 * dx]
         for a in range(2) for b in range(2)
         for dy in range(2) for dx in range(2)],
        axis=0).astype(_MXU_DTYPE)                         # (16, Cmid, Cout)

    bd2 = b_down.reshape(1, Cmid).astype(jnp.float32)
    bu2 = b_up.reshape(1, Cout).astype(jnp.float32)

    kernel = functools.partial(_unet_inner_kernel, Ho=Ho, Wo=Wo,
                               Cin=Cin, Cmid=Cmid, Cout=Cout)
    y_flat = pl.pallas_call(
        kernel,
        out_shape=jax.ShapeDtypeStruct((B, 4 * npix, Cout), jnp.float32),
        grid=(B,),
        in_specs=[
            pl.BlockSpec((None, Ho + 1, Wo + 1, 4 * Cin),
                         lambda b: (b, 0, 0, 0)),              # per-image input
            pl.BlockSpec((4, 4 * Cin, Cmid), lambda b: (0, 0, 0)),   # resident
            pl.BlockSpec((1, Cmid), lambda b: (0, 0)),               # resident
            pl.BlockSpec((16, Cmid, Cout), lambda b: (0, 0, 0)),     # resident
            pl.BlockSpec((1, Cout), lambda b: (0, 0)),               # resident
        ],
        out_specs=pl.BlockSpec((None, 4 * npix, Cout), lambda b: (b, 0, 0)),
        scratch_shapes=[pltpu.VMEM((Ho + 2, Wo + 2, Cmid), _MXU_DTYPE)],
        compiler_params=pltpu.CompilerParams(
            dimension_semantics=("parallel",),
            vmem_limit_bytes=32 * 1024 * 1024),
    )(xph, wdt, bd2, wut, bu2)

    # --- exit boundary: interleave the 4 output phases, back to NCHW --------
    # row = (a*2+b)*npix + i*Wo + j  ->  output pixel (2i+a, 2j+b)
    y = y_flat.reshape(B, 2, 2, Ho, Wo, Cout)
    y = jnp.transpose(y, (0, 5, 3, 1, 4, 2)).reshape(B, Cout, H, W)

    # --- torch.concat([x, model(x)], dim=1) ----------------------------------
    return jnp.concatenate([x, y], axis=1)


# --------------------------- pure-JAX reference ------------------------------

def _reference(x, params):
    """XLA reference of the same forward pass (for the self-check)."""
    w_down, b_down, w_up, b_up = params
    hp = jax.lax.Precision.HIGHEST
    xp = jnp.pad(x, ((0, 0), (0, 0), (1, 1), (1, 1)), mode="reflect")
    mid = jax.lax.conv_general_dilated(
        xp, w_down, window_strides=(2, 2), padding="VALID",
        dimension_numbers=("NCHW", "OIHW", "NCHW"), precision=hp)
    mid = jnp.maximum(mid + b_down[None, :, None, None], 0.0)
    # ConvTranspose2d(k=4, s=2, p=1) == lhs-dilated conv with flipped/swapped W
    w_t = jnp.transpose(w_up, (1, 0, 2, 3))[:, :, ::-1, ::-1]
    y = jax.lax.conv_general_dilated(
        mid, w_t, window_strides=(1, 1), padding=((2, 2), (2, 2)),
        lhs_dilation=(2, 2), dimension_numbers=("NCHW", "OIHW", "NCHW"),
        precision=hp)
    y = y + b_up[None, :, None, None]
    mean = jnp.mean(y, axis=(2, 3), keepdims=True)
    var = jnp.mean((y - mean) ** 2, axis=(2, 3), keepdims=True)
    y = jnp.maximum((y - mean) * jax.lax.rsqrt(var + 1e-5), 0.0)
    return jnp.concatenate([x, y], axis=1)


# ---------------------------------- main --------------------------------------

if __name__ == "__main__":
    B, in_depth, inner_depth, out_depth = 2, 4, 8, 4
    H = W = 16
    k = 4

    key = jax.random.PRNGKey(0)
    kx, kw1, kb1, kw2, kb2 = jax.random.split(key, 5)

    x = jax.random.normal(kx, (B, in_depth, H, W), dtype=jnp.float32)
    w_down = 0.1 * jax.random.normal(kw1, (inner_depth, in_depth, k, k), jnp.float32)
    b_down = 0.1 * jax.random.normal(kb1, (inner_depth,), jnp.float32)
    # ConvTranspose2d weight shape: (in_channels=inner_depth, out_channels=out_depth, k, k)
    w_up = 0.1 * jax.random.normal(kw2, (inner_depth, out_depth, k, k), jnp.float32)
    b_up = 0.1 * jax.random.normal(kb2, (out_depth,), jnp.float32)
    params = (w_down, b_down, w_up, b_up)

    out = jax.jit(unet_block_innermost)(x, params)
    out = jax.block_until_ready(out)
    assert out.shape == (B, in_depth + out_depth, H, W), out.shape

    # correctness self-check against the pure-JAX reference
    ref = jax.block_until_ready(_reference(x, params))
    max_err = float(jnp.max(jnp.abs(out - ref)))
    assert max_err < 5e-2, f"max abs error vs reference: {max_err}"

    print("KERNEL_OK")
</pallas_src>

<mosaic_0001>
module attributes {stable_mosaic.version = 11 : i64} {
  func.func @_unet_inner_kernel(%arg0: i32, %arg1: memref<1x9x9x16xf32, #tpu.memory_space<vmem>>, %arg2: memref<4x16x8xf32, #tpu.memory_space<vmem>>, %arg3: memref<1x8xf32, #tpu.memory_space<vmem>>, %arg4: memref<16x8x4xf32, #tpu.memory_space<vmem>>, %arg5: memref<1x4xf32, #tpu.memory_space<vmem>>, %arg6: memref<1x256x4xf32, #tpu.memory_space<vmem>>, %arg7: memref<10x10x8xf32, #tpu.memory_space<vmem>>) attributes {dimension_semantics = [#tpu.dimension_semantics<parallel>], iteration_bounds = array<i64: 2>, scalar_prefetch = 0 : i64, scratch_operands = 1 : i64, tpu.core_type = #tpu.core_type<tc>, window_params = [{transform_indices = @transform_0, window_bounds = array<i64: 1, 9, 9, 16>}, {pipeline_mode = #tpu.pipeline_mode<synchronous>, transform_indices = @transform_1, window_bounds = array<i64: 4, 16, 8>}, {pipeline_mode = #tpu.pipeline_mode<synchronous>, transform_indices = @transform_2, window_bounds = array<i64: 1, 8>}, {pipeline_mode = #tpu.pipeline_mode<synchronous>, transform_indices = @transform_3, window_bounds = array<i64: 16, 8, 4>}, {pipeline_mode = #tpu.pipeline_mode<synchronous>, transform_indices = @transform_4, window_bounds = array<i64: 1, 4>}, {transform_indices = @transform_5, window_bounds = array<i64: 1, 256, 4>}]} {
    %cst = arith.constant 0.000000e+00 : f32
    %0 = vector.broadcast %cst : f32 to vector<64x8xf32>
    %c0 = arith.constant 0 : index
    %c0_0 = arith.constant 0 : index
    %c0_1 = arith.constant 0 : index
    %c0_2 = arith.constant 0 : index
    %1 = vector.load %arg1[%c0, %c0_0, %c0_1, %c0_2] : memref<1x9x9x16xf32, #tpu.memory_space<vmem>>, vector<1x8x8x16xf32>
    %2 = vector.shape_cast %1 : vector<1x8x8x16xf32> to vector<8x8x16xf32>
    %3 = vector.shape_cast %2 : vector<8x8x16xf32> to vector<64x16xf32>
    %c0_3 = arith.constant 0 : index
    %c0_4 = arith.constant 0 : index
    %c0_5 = arith.constant 0 : index
    %4 = vector.load %arg2[%c0_3, %c0_4, %c0_5] : memref<4x16x8xf32, #tpu.memory_space<vmem>>, vector<1x16x8xf32>
    %5 = vector.shape_cast %4 : vector<1x16x8xf32> to vector<16x8xf32>
    %cst_6 = arith.constant dense<0.000000e+00> : vector<64x8xf32>
    %6 = tpu.matmul %3, %5, %cst_6 {dimension_numbers = #tpu.dot_dimension_numbers<[1], [0], [0], [1], [0, 0, 1, 1], [], []>} : vector<64x16xf32>, vector<16x8xf32>, vector<64x8xf32> -> vector<64x8xf32>
    %7 = arith.addf %0, %6 : vector<64x8xf32>
    %c0_7 = arith.constant 0 : index
    %c0_8 = arith.constant 0 : index
    %c1 = arith.constant 1 : index
    %c0_9 = arith.constant 0 : index
    %8 = vector.load %arg1[%c0_7, %c0_8, %c1, %c0_9] : memref<1x9x9x16xf32, #tpu.memory_space<vmem>>, vector<1x8x8x16xf32>
    %9 = vector.shape_cast %8 : vector<1x8x8x16xf32> to vector<8x8x16xf32>
    %10 = vector.shape_cast %9 : vector<8x8x16xf32> to vector<64x16xf32>
    %c1_10 = arith.constant 1 : index
    %c0_11 = arith.constant 0 : index
    %c0_12 = arith.constant 0 : index
    %11 = vector.load %arg2[%c1_10, %c0_11, %c0_12] : memref<4x16x8xf32, #tpu.memory_space<vmem>>, vector<1x16x8xf32>
    %12 = vector.shape_cast %11 : vector<1x16x8xf32> to vector<16x8xf32>
    %cst_13 = arith.constant dense<0.000000e+00> : vector<64x8xf32>
    %13 = tpu.matmul %10, %12, %cst_13 {dimension_numbers = #tpu.dot_dimension_numbers<[1], [0], [0], [1], [0, 0, 1, 1], [], []>} : vector<64x16xf32>, vector<16x8xf32>, vector<64x8xf32> -> vector<64x8xf32>
    %14 = arith.addf %7, %13 : vector<64x8xf32>
    %c0_14 = arith.constant 0 : index
    %c1_15 = arith.constant 1 : index
    %c0_16 = arith.constant 0 : index
    %c0_17 = arith.constant 0 : index
    %15 = vector.load %arg1[%c0_14, %c1_15, %c0_16, %c0_17] : memref<1x9x9x16xf32, #tpu.memory_space<vmem>>, vector<1x8x8x16xf32>
    %16 = vector.shape_cast %15 : vector<1x8x8x16xf32> to vector<8x8x16xf32>
    %17 = vector.shape_cast %16 : vector<8x8x16xf32> to vector<64x16xf32>
    %c2 = arith.constant 2 : index
    %c0_18 = arith.constant 0 : index
    %c0_19 = arith.constant 0 : index
    %18 = vector.load %arg2[%c2, %c0_18, %c0_19] : memref<4x16x8xf32, #tpu.memory_space<vmem>>, vector<1x16x8xf32>
    %19 = vector.shape_cast %18 : vector<1x16x8xf32> to vector<16x8xf32>
    %cst_20 = arith.constant dense<0.000000e+00> : vector<64x8xf32>
    %20 = tpu.matmul %17, %19, %cst_20 {dimension_numbers = #tpu.dot_dimension_numbers<[1], [0], [0], [1], [0, 0, 1, 1], [], []>} : vector<64x16xf32>, vector<16x8xf32>, vector<64x8xf32> -> vector<64x8xf32>
    %21 = arith.addf %14, %20 : vector<64x8xf32>
    %c0_21 = arith.constant 0 : index
    %c1_22 = arith.constant 1 : index
    %c1_23 = arith.constant 1 : index
    %c0_24 = arith.constant 0 : index
    %22 = vector.load %arg1[%c0_21, %c1_22, %c1_23, %c0_24] : memref<1x9x9x16xf32, #tpu.memory_space<vmem>>, vector<1x8x8x16xf32>
    %23 = vector.shape_cast %22 : vector<1x8x8x16xf32> to vector<8x8x16xf32>
    %24 = vector.shape_cast %23 : vector<8x8x16xf32> to vector<64x16xf32>
    %c3 = arith.constant 3 : index
    %c0_25 = arith.constant 0 : index
    %c0_26 = arith.constant 0 : index
    %25 = vector.load %arg2[%c3, %c0_25, %c0_26] : memref<4x16x8xf32, #tpu.memory_space<vmem>>, vector<1x16x8xf32>
    %26 = vector.shape_cast %25 : vector<1x16x8xf32> to vector<16x8xf32>
    %cst_27 = arith.constant dense<0.000000e+00> : vector<64x8xf32>
    %27 = tpu.matmul %24, %26, %cst_27 {dimension_numbers = #tpu.dot_dimension_numbers<[1], [0], [0], [1], [0, 0, 1, 1], [], []>} : vector<64x16xf32>, vector<16x8xf32>, vector<64x8xf32> -> vector<64x8xf32>
    %28 = arith.addf %21, %27 : vector<64x8xf32>
    %c0_28 = arith.constant 0 : index
    %c0_29 = arith.constant 0 : index
    %29 = vector.load %arg3[%c0_28, %c0_29] : memref<1x8xf32, #tpu.memory_space<vmem>>, vector<1x8xf32>
    %30 = vector.broadcast %29 : vector<1x8xf32> to vector<64x8xf32>
    %31 = arith.addf %28, %30 : vector<64x8xf32>
    %cst_30 = arith.constant 0.000000e+00 : f32
    %32 = vector.broadcast %cst_30 : f32 to vector<64x8xf32>
    %33 = arith.maximumf %31, %32 : vector<64x8xf32>
    %cst_31 = arith.constant 0.000000e+00 : f32
    %34 = vector.broadcast %cst_31 : f32 to vector<10x10x8xf32>
    %c0_32 = arith.constant 0 : index
    %c0_33 = arith.constant 0 : index
    %c0_34 = arith.constant 0 : index
    %35 = vector.load %arg7[%c0_32, %c0_33, %c0_34] : memref<10x10x8xf32, #tpu.memory_space<vmem>>, vector<10x10x8xf32>
    tpu.vector_store %arg7[%c0_32, %c0_33, %c0_34], %34 {strides = array<i32>} : memref<10x10x8xf32, #tpu.memory_space<vmem>>, vector<10x10x8xf32>,
    %36 = vector.shape_cast %33 : vector<64x8xf32> to vector<8x8x8xf32>
    %c1_35 = arith.constant 1 : index
    %c1_36 = arith.constant 1 : index
    %c0_37 = arith.constant 0 : index
    %37 = vector.load %arg7[%c1_35, %c1_36, %c0_37] : memref<10x10x8xf32, #tpu.memory_space<vmem>>, vector<8x8x8xf32>
    tpu.vector_store %arg7[%c1_35, %c1_36, %c0_37], %36 {strides = array<i32>} : memref<10x10x8xf32, #tpu.memory_space<vmem>>, vector<8x8x8xf32>,
    %cst_38 = arith.constant 0.000000e+00 : f32
    %38 = vector.broadcast %cst_38 : f32 to vector<1x4xf32>
    %cst_39 = arith.constant 0.000000e+00 : f32
    %39 = vector.broadcast %cst_39 : f32 to vector<64x4xf32>
    %c0_40 = arith.constant 0 : index
    %c0_41 = arith.constant 0 : index
    %c0_42 = arith.constant 0 : index
    %40 = vector.load %arg7[%c0_40, %c0_41, %c0_42] : memref<10x10x8xf32, #tpu.memory_space<vmem>>, vector<8x8x8xf32>
    %41 = vector.shape_cast %40 : vector<8x8x8xf32> to vector<64x8xf32>
    %c0_43 = arith.constant 0 : index
    %c0_44 = arith.constant 0 : index
    %c0_45 = arith.constant 0 : index
    %42 = vector.load %arg4[%c0_43, %c0_44, %c0_45] : memref<16x8x4xf32, #tpu.memory_space<vmem>>, vector<1x8x4xf32>
    %43 = vector.shape_cast %42 : vector<1x8x4xf32> to vector<8x4xf32>
    %cst_46 = arith.constant dense<0.000000e+00> : vector<64x4xf32>
    %44 = tpu.matmul %41, %43, %cst_46 {dimension_numbers = #tpu.dot_dimension_numbers<[1], [0], [0], [1], [0, 0, 1, 1], [], []>} : vector<64x8xf32>, vector<8x4xf32>, vector<64x4xf32> -> vector<64x4xf32>
    %45 = arith.addf %39, %44 : vector<64x4xf32>
    %c0_47 = arith.constant 0 : index
    %c1_48 = arith.constant 1 : index
    %c0_49 = arith.constant 0 : index
    %46 = vector.load %arg7[%c0_47, %c1_48, %c0_49] : memref<10x10x8xf32, #tpu.memory_space<vmem>>, vector<8x8x8xf32>
    %47 = vector.shape_cast %46 : vector<8x8x8xf32> to vector<64x8xf32>
    %c1_50 = arith.constant 1 : index
    %c0_51 = arith.constant 0 : index
    %c0_52 = arith.constant 0 : index
    %48 = vector.load %arg4[%c1_50, %c0_51, %c0_52] : memref<16x8x4xf32, #tpu.memory_space<vmem>>, vector<1x8x4xf32>
    %49 = vector.shape_cast %48 : vector<1x8x4xf32> to vector<8x4xf32>
    %cst_53 = arith.constant dense<0.000000e+00> : vector<64x4xf32>
    %50 = tpu.matmul %47, %49, %cst_53 {dimension_numbers = #tpu.dot_dimension_numbers<[1], [0], [0], [1], [0, 0, 1, 1], [], []>} : vector<64x8xf32>, vector<8x4xf32>, vector<64x4xf32> -> vector<64x4xf32>
    %51 = arith.addf %45, %50 : vector<64x4xf32>
    %c1_54 = arith.constant 1 : index
    %c0_55 = arith.constant 0 : index
    %c0_56 = arith.constant 0 : index
    %52 = vector.load %arg7[%c1_54, %c0_55, %c0_56] : memref<10x10x8xf32, #tpu.memory_space<vmem>>, vector<8x8x8xf32>
    %53 = vector.shape_cast %52 : vector<8x8x8xf32> to vector<64x8xf32>
    %c2_57 = arith.constant 2 : index
    %c0_58 = arith.constant 0 : index
    %c0_59 = arith.constant 0 : index
    %54 = vector.load %arg4[%c2_57, %c0_58, %c0_59] : memref<16x8x4xf32, #tpu.memory_space<vmem>>, vector<1x8x4xf32>
    %55 = vector.shape_cast %54 : vector<1x8x4xf32> to vector<8x4xf32>
    %cst_60 = arith.constant dense<0.000000e+00> : vector<64x4xf32>
    %56 = tpu.matmul %53, %55, %cst_60 {dimension_numbers = #tpu.dot_dimension_numbers<[1], [0], [0], [1], [0, 0, 1, 1], [], []>} : vector<64x8xf32>, vector<8x4xf32>, vector<64x4xf32> -> vector<64x4xf32>
    %57 = arith.addf %51, %56 : vector<64x4xf32>
    %c1_61 = arith.constant 1 : index
    %c1_62 = arith.constant 1 : index
    %c0_63 = arith.constant 0 : index
    %58 = vector.load %arg7[%c1_61, %c1_62, %c0_63] : memref<10x10x8xf32, #tpu.memory_space<vmem>>, vector<8x8x8xf32>
    %59 = vector.shape_cast %58 : vector<8x8x8xf32> to vector<64x8xf32>
    %c3_64 = arith.constant 3 : index
    %c0_65 = arith.constant 0 : index
    %c0_66 = arith.constant 0 : index
    %60 = vector.load %arg4[%c3_64, %c0_65, %c0_66] : memref<16x8x4xf32, #tpu.memory_space<vmem>>, vector<1x8x4xf32>
    %61 = vector.shape_cast %60 : vector<1x8x4xf32> to vector<8x4xf32>
    %cst_67 = arith.constant dense<0.000000e+00> : vector<64x4xf32>
    %62 = tpu.matmul %59, %61, %cst_67 {dimension_numbers = #tpu.dot_dimension_numbers<[1], [0], [0], [1], [0, 0, 1, 1], [], []>} : vector<64x8xf32>, vector<8x4xf32>, vector<64x4xf32> -> vector<64x4xf32>
    %63 = arith.addf %57, %62 : vector<64x4xf32>
    %c0_68 = arith.constant 0 : index
    %c0_69 = arith.constant 0 : index
    %64 = vector.load %arg5[%c0_68, %c0_69] : memref<1x4xf32, #tpu.memory_space<vmem>>, vector<1x4xf32>
    %65 = vector.broadcast %64 : vector<1x4xf32> to vector<64x4xf32>
    %66 = arith.addf %63, %65 : vector<64x4xf32>
    %cst_70 = arith.constant dense<0.000000e+00> : vector<4xf32>
    %67 = vector.multi_reduction <add>, %66, %cst_70 [0] : vector<64x4xf32> to vector<4xf32>
    %68 = vector.shape_cast %67 : vector<4xf32> to vector<1x4xf32>
    %69 = arith.addf %38, %68 : vector<1x4xf32>
    %cst_71 = arith.constant 0.000000e+00 : f32
    %70 = vector.broadcast %cst_71 : f32 to vector<64x4xf32>
    %c0_72 = arith.constant 0 : index
    %c1_73 = arith.constant 1 : index
    %c0_74 = arith.constant 0 : index
    %71 = vector.load %arg7[%c0_72, %c1_73, %c0_74] : memref<10x10x8xf32, #tpu.memory_space<vmem>>, vector<8x8x8xf32>
    %72 = vector.shape_cast %71 : vector<8x8x8xf32> to vector<64x8xf32>
    %c4 = arith.constant 4 : index
    %c0_75 = arith.constant 0 : index
    %c0_76 = arith.constant 0 : index
    %73 = vector.load %arg4[%c4, %c0_75, %c0_76] : memref<16x8x4xf32, #tpu.memory_space<vmem>>, vector<1x8x4xf32>
    %74 = vector.shape_cast %73 : vector<1x8x4xf32> to vector<8x4xf32>
    %cst_77 = arith.constant dense<0.000000e+00> : vector<64x4xf32>
    %75 = tpu.matmul %72, %74, %cst_77 {dimension_numbers = #tpu.dot_dimension_numbers<[1], [0], [0], [1], [0, 0, 1, 1], [], []>} : vector<64x8xf32>, vector<8x4xf32>, vector<64x4xf32> -> vector<64x4xf32>
    %76 = arith.addf %70, %75 : vector<64x4xf32>
    %c0_78 = arith.constant 0 : index
    %c2_79 = arith.constant 2 : index
    %c0_80 = arith.constant 0 : index
    %77 = vector.load %arg7[%c0_78, %c2_79, %c0_80] : memref<10x10x8xf32, #tpu.memory_space<vmem>>, vector<8x8x8xf32>
    %78 = vector.shape_cast %77 : vector<8x8x8xf32> to vector<64x8xf32>
    %c5 = arith.constant 5 : index
    %c0_81 = arith.constant 0 : index
    %c0_82 = arith.constant 0 : index
    %79 = vector.load %arg4[%c5, %c0_81, %c0_82] : memref<16x8x4xf32, #tpu.memory_space<vmem>>, vector<1x8x4xf32>
    %80 = vector.shape_cast %79 : vector<1x8x4xf32> to vector<8x4xf32>
    %cst_83 = arith.constant dense<0.000000e+00> : vector<64x4xf32>
    %81 = tpu.matmul %78, %80, %cst_83 {dimension_numbers = #tpu.dot_dimension_numbers<[1], [0], [0], [1], [0, 0, 1, 1], [], []>} : vector<64x8xf32>, vector<8x4xf32>, vector<64x4xf32> -> vector<64x4xf32>
    %82 = arith.addf %76, %81 : vector<64x4xf32>
    %c1_84 = arith.constant 1 : index
    %c1_85 = arith.constant 1 : index
    %c0_86 = arith.constant 0 : index
    %83 = vector.load %arg7[%c1_84, %c1_85, %c0_86] : memref<10x10x8xf32, #tpu.memory_space<vmem>>, vector<8x8x8xf32>
    %84 = vector.shape_cast %83 : vector<8x8x8xf32> to vector<64x8xf32>
    %c6 = arith.constant 6 : index
    %c0_87 = arith.constant 0 : index
    %c0_88 = arith.constant 0 : index
    %85 = vector.load %arg4[%c6, %c0_87, %c0_88] : memref<16x8x4xf32, #tpu.memory_space<vmem>>, vector<1x8x4xf32>
    %86 = vector.shape_cast %85 : vector<1x8x4xf32> to vector<8x4xf32>
    %cst_89 = arith.constant dense<0.000000e+00> : vector<64x4xf32>
    %87 = tpu.matmul %84, %86, %cst_89 {dimension_numbers = #tpu.dot_dimension_numbers<[1], [0], [0], [1], [0, 0, 1, 1], [], []>} : vector<64x8xf32>, vector<8x4xf32>, vector<64x4xf32> -> vector<64x4xf32>
    %88 = arith.addf %82, %87 : vector<64x4xf32>
    %c1_90 = arith.constant 1 : index
    %c2_91 = arith.constant 2 : index
    %c0_92 = arith.constant 0 : index
    %89 = vector.load %arg7[%c1_90, %c2_91, %c0_92] : memref<10x10x8xf32, #tpu.memory_space<vmem>>, vector<8x8x8xf32>
    %90 = vector.shape_cast %89 : vector<8x8x8xf32> to vector<64x8xf32>
    %c7 = arith.constant 7 : index
    %c0_93 = arith.constant 0 : index
    %c0_94 = arith.constant 0 : index
    %91 = vector.load %arg4[%c7, %c0_93, %c0_94] : memref<16x8x4xf32, #tpu.memory_space<vmem>>, vector<1x8x4xf32>
    %92 = vector.shape_cast %91 : vector<1x8x4xf32> to vector<8x4xf32>
    %cst_95 = arith.constant dense<0.000000e+00> : vector<64x4xf32>
    %93 = tpu.matmul %90, %92, %cst_95 {dimension_numbers = #tpu.dot_dimension_numbers<[1], [0], [0], [1], [0, 0, 1, 1], [], []>} : vector<64x8xf32>, vector<8x4xf32>, vector<64x4xf32> -> vector<64x4xf32>
    %94 = arith.addf %88, %93 : vector<64x4xf32>
    %c0_96 = arith.constant 0 : index
    %c0_97 = arith.constant 0 : index
    %95 = vector.load %arg5[%c0_96, %c0_97] : memref<1x4xf32, #tpu.memory_space<vmem>>, vector<1x4xf32>
    %96 = vector.broadcast %95 : vector<1x4xf32> to vector<64x4xf32>
    %97 = arith.addf %94, %96 : vector<64x4xf32>
    %cst_98 = arith.constant dense<0.000000e+00> : vector<4xf32>
    %98 = vector.multi_reduction <add>, %97, %cst_98 [0] : vector<64x4xf32> to vector<4xf32>
    %99 = vector.shape_cast %98 : vector<4xf32> to vector<1x4xf32>
    %100 = arith.addf %69, %99 : vector<1x4xf32>
    %cst_99 = arith.constant 0.000000e+00 : f32
    %101 = vector.broadcast %cst_99 : f32 to vector<64x4xf32>
    %c1_100 = arith.constant 1 : index
    %c0_101 = arith.constant 0 : index
    %c0_102 = arith.constant 0 : index
    %102 = vector.load %arg7[%c1_100, %c0_101, %c0_102] : memref<10x10x8xf32, #tpu.memory_space<vmem>>, vector<8x8x8xf32>
    %103 = vector.shape_cast %102 : vector<8x8x8xf32> to vector<64x8xf32>
    %c8 = arith.constant 8 : index
    %c0_103 = arith.constant 0 : index
    %c0_104 = arith.constant 0 : index
    %104 = vector.load %arg4[%c8, %c0_103, %c0_104] : memref<16x8x4xf32, #tpu.memory_space<vmem>>, vector<1x8x4xf32>
    %105 = vector.shape_cast %104 : vector<1x8x4xf32> to vector<8x4xf32>
    %cst_105 = arith.constant dense<0.000000e+00> : vector<64x4xf32>
    %106 = tpu.matmul %103, %105, %cst_105 {dimension_numbers = #tpu.dot_dimension_numbers<[1], [0], [0], [1], [0, 0, 1, 1], [], []>} : vector<64x8xf32>, vector<8x4xf32>, vector<64x4xf32> -> vector<64x4xf32>
    %107 = arith.addf %101, %106 : vector<64x4xf32>
    %c1_106 = arith.constant 1 : index
    %c1_107 = arith.constant 1 : index
    %c0_108 = arith.constant 0 : index
    %108 = vector.load %arg7[%c1_106, %c1_107, %c0_108] : memref<10x10x8xf32, #tpu.memory_space<vmem>>, vector<8x8x8xf32>
    %109 = vector.shape_cast %108 : vector<8x8x8xf32> to vector<64x8xf32>
    %c9 = arith.constant 9 : index
    %c0_109 = arith.constant 0 : index
    %c0_110 = arith.constant 0 : index
    %110 = vector.load %arg4[%c9, %c0_109, %c0_110] : memref<16x8x4xf32, #tpu.memory_space<vmem>>, vector<1x8x4xf32>
    %111 = vector.shape_cast %110 : vector<1x8x4xf32> to vector<8x4xf32>
    %cst_111 = arith.constant dense<0.000000e+00> : vector<64x4xf32>
    %112 = tpu.matmul %109, %111, %cst_111 {dimension_numbers = #tpu.dot_dimension_numbers<[1], [0], [0], [1], [0, 0, 1, 1], [], []>} : vector<64x8xf32>, vector<8x4xf32>, vector<64x4xf32> -> vector<64x4xf32>
    %113 = arith.addf %107, %112 : vector<64x4xf32>
    %c2_112 = arith.constant 2 : index
    %c0_113 = arith.constant 0 : index
    %c0_114 = arith.constant 0 : index
    %114 = vector.load %arg7[%c2_112, %c0_113, %c0_114] : memref<10x10x8xf32, #tpu.memory_space<vmem>>, vector<8x8x8xf32>
    %115 = vector.shape_cast %114 : vector<8x8x8xf32> to vector<64x8xf32>
    %c10 = arith.constant 10 : index
    %c0_115 = arith.constant 0 : index
    %c0_116 = arith.constant 0 : index
    %116 = vector.load %arg4[%c10, %c0_115, %c0_116] : memref<16x8x4xf32, #tpu.memory_space<vmem>>, vector<1x8x4xf32>
    %117 = vector.shape_cast %116 : vector<1x8x4xf32> to vector<8x4xf32>
    %cst_117 = arith.constant dense<0.000000e+00> : vector<64x4xf32>
    %118 = tpu.matmul %115, %117, %cst_117 {dimension_numbers = #tpu.dot_dimension_numbers<[1], [0], [0], [1], [0, 0, 1, 1], [], []>} : vector<64x8xf32>, vector<8x4xf32>, vector<64x4xf32> -> vector<64x4xf32>
    %119 = arith.addf %113, %118 : vector<64x4xf32>
    %c2_118 = arith.constant 2 : index
    %c1_119 = arith.constant 1 : index
    %c0_120 = arith.constant 0 : index
    %120 = vector.load %arg7[%c2_118, %c1_119, %c0_120] : memref<10x10x8xf32, #tpu.memory_space<vmem>>, vector<8x8x8xf32>
    %121 = vector.shape_cast %120 : vector<8x8x8xf32> to vector<64x8xf32>
    %c11 = arith.constant 11 : index
    %c0_121 = arith.constant 0 : index
    %c0_122 = arith.constant 0 : index
    %122 = vector.load %arg4[%c11, %c0_121, %c0_122] : memref<16x8x4xf32, #tpu.memory_space<vmem>>, vector<1x8x4xf32>
    %123 = vector.shape_cast %122 : vector<1x8x4xf32> to vector<8x4xf32>
    %cst_123 = arith.constant dense<0.000000e+00> : vector<64x4xf32>
    %124 = tpu.matmul %121, %123, %cst_123 {dimension_numbers = #tpu.dot_dimension_numbers<[1], [0], [0], [1], [0, 0, 1, 1], [], []>} : vector<64x8xf32>, vector<8x4xf32>, vector<64x4xf32> -> vector<64x4xf32>
    %125 = arith.addf %119, %124 : vector<64x4xf32>
    %c0_124 = arith.constant 0 : index
    %c0_125 = arith.constant 0 : index
    %126 = vector.load %arg5[%c0_124, %c0_125] : memref<1x4xf32, #tpu.memory_space<vmem>>, vector<1x4xf32>
    %127 = vector.broadcast %126 : vector<1x4xf32> to vector<64x4xf32>
    %128 = arith.addf %125, %127 : vector<64x4xf32>
    %cst_126 = arith.constant dense<0.000000e+00> : vector<4xf32>
    %129 = vector.multi_reduction <add>, %128, %cst_126 [0] : vector<64x4xf32> to vector<4xf32>
    %130 = vector.shape_cast %129 : vector<4xf32> to vector<1x4xf32>
    %131 = arith.addf %100, %130 : vector<1x4xf32>
    %cst_127 = arith.constant 0.000000e+00 : f32
    %132 = vector.broadcast %cst_127 : f32 to vector<64x4xf32>
    %c1_128 = arith.constant 1 : index
    %c1_129 = arith.constant 1 : index
    %c0_130 = arith.constant 0 : index
    %133 = vector.load %arg7[%c1_128, %c1_129, %c0_130] : memref<10x10x8xf32, #tpu.memory_space<vmem>>, vector<8x8x8xf32>
    %134 = vector.shape_cast %133 : vector<8x8x8xf32> to vector<64x8xf32>
    %c12 = arith.constant 12 : index
    %c0_131 = arith.constant 0 : index
    %c0_132 = arith.constant 0 : index
    %135 = vector.load %arg4[%c12, %c0_131, %c0_132] : memref<16x8x4xf32, #tpu.memory_space<vmem>>, vector<1x8x4xf32>
    %136 = vector.shape_cast %135 : vector<1x8x4xf32> to vector<8x4xf32>
    %cst_133 = arith.constant dense<0.000000e+00> : vector<64x4xf32>
    %137 = tpu.matmul %134, %136, %cst_133 {dimension_numbers = #tpu.dot_dimension_numbers<[1], [0], [0], [1], [0, 0, 1, 1], [], []>} : vector<64x8xf32>, vector<8x4xf32>, vector<64x4xf32> -> vector<64x4xf32>
    %138 = arith.addf %132, %137 : vector<64x4xf32>
    %c1_134 = arith.constant 1 : index
    %c2_135 = arith.constant 2 : index
    %c0_136 = arith.constant 0 : index
    %139 = vector.load %arg7[%c1_134, %c2_135, %c0_136] : memref<10x10x8xf32, #tpu.memory_space<vmem>>, vector<8x8x8xf32>
    %140 = vector.shape_cast %139 : vector<8x8x8xf32> to vector<64x8xf32>
    %c13 = arith.constant 13 : index
    %c0_137 = arith.constant 0 : index
    %c0_138 = arith.constant 0 : index
    %141 = vector.load %arg4[%c13, %c0_137, %c0_138] : memref<16x8x4xf32, #tpu.memory_space<vmem>>, vector<1x8x4xf32>
    %142 = vector.shape_cast %141 : vector<1x8x4xf32> to vector<8x4xf32>
    %cst_139 = arith.constant dense<0.000000e+00> : vector<64x4xf32>
    %143 = tpu.matmul %140, %142, %cst_139 {dimension_numbers = #tpu.dot_dimension_numbers<[1], [0], [0], [1], [0, 0, 1, 1], [], []>} : vector<64x8xf32>, vector<8x4xf32>, vector<64x4xf32> -> vector<64x4xf32>
    %144 = arith.addf %138, %143 : vector<64x4xf32>
    %c2_140 = arith.constant 2 : index
    %c1_141 = arith.constant 1 : index
    %c0_142 = arith.constant 0 : index
    %145 = vector.load %arg7[%c2_140, %c1_141, %c0_142] : memref<10x10x8xf32, #tpu.memory_space<vmem>>, vector<8x8x8xf32>
    %146 = vector.shape_cast %145 : vector<8x8x8xf32> to vector<64x8xf32>
    %c14 = arith.constant 14 : index
    %c0_143 = arith.constant 0 : index
    %c0_144 = arith.constant 0 : index
    %147 = vector.load %arg4[%c14, %c0_143, %c0_144] : memref<16x8x4xf32, #tpu.memory_space<vmem>>, vector<1x8x4xf32>
    %148 = vector.shape_cast %147 : vector<1x8x4xf32> to vector<8x4xf32>
    %cst_145 = arith.constant dense<0.000000e+00> : vector<64x4xf32>
    %149 = tpu.matmul %146, %148, %cst_145 {dimension_numbers = #tpu.dot_dimension_numbers<[1], [0], [0], [1], [0, 0, 1, 1], [], []>} : vector<64x8xf32>, vector<8x4xf32>, vector<64x4xf32> -> vector<64x4xf32>
    %150 = arith.addf %144, %149 : vector<64x4xf32>
    %c2_146 = arith.constant 2 : index
    %c2_147 = arith.constant 2 : index
    %c0_148 = arith.constant 0 : index
    %151 = vector.load %arg7[%c2_146, %c2_147, %c0_148] : memref<10x10x8xf32, #tpu.memory_space<vmem>>, vector<8x8x8xf32>
    %152 = vector.shape_cast %151 : vector<8x8x8xf32> to vector<64x8xf32>
    %c15 = arith.constant 15 : index
    %c0_149 = arith.constant 0 : index
    %c0_150 = arith.constant 0 : index
    %153 = vector.load %arg4[%c15, %c0_149, %c0_150] : memref<16x8x4xf32, #tpu.memory_space<vmem>>, vector<1x8x4xf32>
    %154 = vector.shape_cast %153 : vector<1x8x4xf32> to vector<8x4xf32>
    %cst_151 = arith.constant dense<0.000000e+00> : vector<64x4xf32>
    %155 = tpu.matmul %152, %154, %cst_151 {dimension_numbers = #tpu.dot_dimension_numbers<[1], [0], [0], [1], [0, 0, 1, 1], [], []>} : vector<64x8xf32>, vector<8x4xf32>, vector<64x4xf32> -> vector<64x4xf32>
    %156 = arith.addf %150, %155 : vector<64x4xf32>
    %c0_152 = arith.constant 0 : index
    %c0_153 = arith.constant 0 : index
    %157 = vector.load %arg5[%c0_152, %c0_153] : memref<1x4xf32, #tpu.memory_space<vmem>>, vector<1x4xf32>
    %158 = vector.broadcast %157 : vector<1x4xf32> to vector<64x4xf32>
    %159 = arith.addf %156, %158 : vector<64x4xf32>
    %cst_154 = arith.constant dense<0.000000e+00> : vector<4xf32>
    %160 = vector.multi_reduction <add>, %159, %cst_154 [0] : vector<64x4xf32> to vector<4xf32>
    %161 = vector.shape_cast %160 : vector<4xf32> to vector<1x4xf32>
    %162 = arith.addf %131, %161 : vector<1x4xf32>
    %cst_155 = arith.constant 2.560000e+02 : f32
    %163 = vector.broadcast %cst_155 : f32 to vector<1x4xf32>
    %164 = arith.divf %162, %163 : vector<1x4xf32>
    %cst_156 = arith.constant 0.000000e+00 : f32
    %165 = vector.broadcast %cst_156 : f32 to vector<1x4xf32>
    %166 = vector.broadcast %164 : vector<1x4xf32> to vector<64x4xf32>
    %167 = arith.subf %66, %166 : vector<64x4xf32>
    %168 = arith.mulf %167, %167 : vector<64x4xf32>
    %cst_157 = arith.constant dense<0.000000e+00> : vector<4xf32>
    %169 = vector.multi_reduction <add>, %168, %cst_157 [0] : vector<64x4xf32> to vector<4xf32>
    %170 = vector.shape_cast %169 : vector<4xf32> to vector<1x4xf32>
    %171 = arith.addf %165, %170 : vector<1x4xf32>
    %172 = vector.broadcast %164 : vector<1x4xf32> to vector<64x4xf32>
    %173 = arith.subf %97, %172 : vector<64x4xf32>
    %174 = arith.mulf %173, %173 : vector<64x4xf32>
    %cst_158 = arith.constant dense<0.000000e+00> : vector<4xf32>
    %175 = vector.multi_reduction <add>, %174, %cst_158 [0] : vector<64x4xf32> to vector<4xf32>
    %176 = vector.shape_cast %175 : vector<4xf32> to vector<1x4xf32>
    %177 = arith.addf %171, %176 : vector<1x4xf32>
    %178 = vector.broadcast %164 : vector<1x4xf32> to vector<64x4xf32>
    %179 = arith.subf %128, %178 : vector<64x4xf32>
    %180 = arith.mulf %179, %179 : vector<64x4xf32>
    %cst_159 = arith.constant dense<0.000000e+00> : vector<4xf32>
    %181 = vector.multi_reduction <add>, %180, %cst_159 [0] : vector<64x4xf32> to vector<4xf32>
    %182 = vector.shape_cast %181 : vector<4xf32> to vector<1x4xf32>
    %183 = arith.addf %177, %182 : vector<1x4xf32>
    %184 = vector.broadcast %164 : vector<1x4xf32> to vector<64x4xf32>
    %185 = arith.subf %159, %184 : vector<64x4xf32>
    %186 = arith.mulf %185, %185 : vector<64x4xf32>
    %cst_160 = arith.constant dense<0.000000e+00> : vector<4xf32>
    %187 = vector.multi_reduction <add>, %186, %cst_160 [0] : vector<64x4xf32> to vector<4xf32>
    %188 = vector.shape_cast %187 : vector<4xf32> to vector<1x4xf32>
    %189 = arith.addf %183, %188 : vector<1x4xf32>
    %cst_161 = arith.constant 2.560000e+02 : f32
    %190 = vector.broadcast %cst_161 : f32 to vector<1x4xf32>
    %191 = arith.divf %189, %190 : vector<1x4xf32>
    %cst_162 = arith.constant 9.99999974E-6 : f32
    %192 = vector.broadcast %cst_162 : f32 to vector<1x4xf32>
    %193 = arith.addf %191, %192 : vector<1x4xf32>
    %194 = math.rsqrt %193 : vector<1x4xf32>
    %195 = vector.broadcast %164 : vector<1x4xf32> to vector<64x4xf32>
    %196 = arith.subf %66, %195 : vector<64x4xf32>
    %197 = vector.broadcast %194 : vector<1x4xf32> to vector<64x4xf32>
    %198 = arith.mulf %196, %197 : vector<64x4xf32>
    %cst_163 = arith.constant 0.000000e+00 : f32
    %199 = vector.broadcast %cst_163 : f32 to vector<64x4xf32>
    %200 = arith.maximumf %198, %199 : vector<64x4xf32>
    %c0_164 = arith.constant 0 : index
    %c0_165 = arith.constant 0 : index
    %c0_166 = arith.constant 0 : index
    %201 = vector.load %arg6[%c0_164, %c0_165, %c0_166] : memref<1x256x4xf32, #tpu.memory_space<vmem>>, vector<1x64x4xf32>
    %202 = vector.shape_cast %201 : vector<1x64x4xf32> to vector<64x4xf32>
    %203 = vector.shape_cast %200 : vector<64x4xf32> to vector<1x64x4xf32>
    tpu.vector_store %arg6[%c0_164, %c0_165, %c0_166], %203 {strides = array<i32>} : memref<1x256x4xf32, #tpu.memory_space<vmem>>, vector<1x64x4xf32>,
    %204 = vector.broadcast %164 : vector<1x4xf32> to vector<64x4xf32>
    %205 = arith.subf %97, %204 : vector<64x4xf32>
    %206 = vector.broadcast %194 : vector<1x4xf32> to vector<64x4xf32>
    %207 = arith.mulf %205, %206 : vector<64x4xf32>
    %cst_167 = arith.constant 0.000000e+00 : f32
    %208 = vector.broadcast %cst_167 : f32 to vector<64x4xf32>
    %209 = arith.maximumf %207, %208 : vector<64x4xf32>
    %c0_168 = arith.constant 0 : index
    %c64 = arith.constant 64 : index
    %c0_169 = arith.constant 0 : index
    %210 = vector.load %arg6[%c0_168, %c64, %c0_169] : memref<1x256x4xf32, #tpu.memory_space<vmem>>, vector<1x64x4xf32>
    %211 = vector.shape_cast %210 : vector<1x64x4xf32> to vector<64x4xf32>
    %212 = vector.shape_cast %209 : vector<64x4xf32> to vector<1x64x4xf32>
    tpu.vector_store %arg6[%c0_168, %c64, %c0_169], %212 {strides = array<i32>} : memref<1x256x4xf32, #tpu.memory_space<vmem>>, vector<1x64x4xf32>,
    %213 = vector.broadcast %164 : vector<1x4xf32> to vector<64x4xf32>
    %214 = arith.subf %128, %213 : vector<64x4xf32>
    %215 = vector.broadcast %194 : vector<1x4xf32> to vector<64x4xf32>
    %216 = arith.mulf %214, %215 : vector<64x4xf32>
    %cst_170 = arith.constant 0.000000e+00 : f32
    %217 = vector.broadcast %cst_170 : f32 to vector<64x4xf32>
    %218 = arith.maximumf %216, %217 : vector<64x4xf32>
    %c0_171 = arith.constant 0 : index
    %c128 = arith.constant 128 : index
    %c0_172 = arith.constant 0 : index
    %219 = vector.load %arg6[%c0_171, %c128, %c0_172] : memref<1x256x4xf32, #tpu.memory_space<vmem>>, vector<1x64x4xf32>
    %220 = vector.shape_cast %219 : vector<1x64x4xf32> to vector<64x4xf32>
    %221 = vector.shape_cast %218 : vector<64x4xf32> to vector<1x64x4xf32>
    tpu.vector_store %arg6[%c0_171, %c128, %c0_172], %221 {strides = array<i32>} : memref<1x256x4xf32, #tpu.memory_space<vmem>>, vector<1x64x4xf32>,
    %222 = vector.broadcast %164 : vector<1x4xf32> to vector<64x4xf32>
    %223 = arith.subf %159, %222 : vector<64x4xf32>
    %224 = vector.broadcast %194 : vector<1x4xf32> to vector<64x4xf32>
    %225 = arith.mulf %223, %224 : vector<64x4xf32>
    %cst_173 = arith.constant 0.000000e+00 : f32
    %226 = vector.broadcast %cst_173 : f32 to vector<64x4xf32>
    %227 = arith.maximumf %225, %226 : vector<64x4xf32>
    %c0_174 = arith.constant 0 : index
    %c192 = arith.constant 192 : index
    %c0_175 = arith.constant 0 : index
    %228 = vector.load %arg6[%c0_174, %c192, %c0_175] : memref<1x256x4xf32, #tpu.memory_space<vmem>>, vector<1x64x4xf32>
    %229 = vector.shape_cast %228 : vector<1x64x4xf32> to vector<64x4xf32>
    %230 = vector.shape_cast %227 : vector<64x4xf32> to vector<1x64x4xf32>
    tpu.vector_store %arg6[%c0_174, %c192, %c0_175], %230 {strides = array<i32>} : memref<1x256x4xf32, #tpu.memory_space<vmem>>, vector<1x64x4xf32>,
    return
  }
  func.func @transform_0(%arg0: i32) -> (i32, i32, i32, i32) {
    %c0_i32 = arith.constant 0 : i32
    %c0_i32_0 = arith.constant 0 : i32
    %c0_i32_1 = arith.constant 0 : i32
    %c0_i32_2 = arith.constant 0 : i32
    return %arg0, %c0_i32, %c0_i32_0, %c0_i32_1 : i32, i32, i32, i32
  }
  func.func @transform_1(%arg0: i32) -> (i32, i32, i32) {
    %c0_i32 = arith.constant 0 : i32
    %c0_i32_0 = arith.constant 0 : i32
    %c0_i32_1 = arith.constant 0 : i32
    %c0_i32_2 = arith.constant 0 : i32
    return %c0_i32, %c0_i32_0, %c0_i32_1 : i32, i32, i32
  }
  func.func @transform_2(%arg0: i32) -> (i32, i32) {
    %c0_i32 = arith.constant 0 : i32
    %c0_i32_0 = arith.constant 0 : i32
    %c0_i32_1 = arith.constant 0 : i32
    return %c0_i32, %c0_i32_0 : i32, i32
  }
  func.func @transform_3(%arg0: i32) -> (i32, i32, i32) {
    %c0_i32 = arith.constant 0 : i32
    %c0_i32_0 = arith.constant 0 : i32
    %c0_i32_1 = arith.constant 0 : i32
    %c0_i32_2 = arith.constant 0 : i32
    return %c0_i32, %c0_i32_0, %c0_i32_1 : i32, i32, i32
  }
  func.func @transform_4(%arg0: i32) -> (i32, i32) {
    %c0_i32 = arith.constant 0 : i32
    %c0_i32_0 = arith.constant 0 : i32
    %c0_i32_1 = arith.constant 0 : i32
    return %c0_i32, %c0_i32_0 : i32, i32
  }
  func.func @transform_5(%arg0: i32) -> (i32, i32, i32) {
    %c0_i32 = arith.constant 0 : i32
    %c0_i32_0 = arith.constant 0 : i32
    %c0_i32_1 = arith.constant 0 : i32
    return %arg0, %c0_i32, %c0_i32_0 : i32, i32, i32
  }
}

</mosaic_0001>

<llo_original>
// kernel: unet_block_innermost.1
$region0: #{unet_block_innermost.1}
  #allocation0 [shape = 'u32[]', space=smem, size = 0x4, offset = 0x4, fixed_abs, tag = 'smem constant byte address 0x4 - core index']
  #allocation1 [shape = 'u32[72,128]{1,0:T(1,128)}', space=vmem, size = 0x9000, scoped, tag = 'internal scratch']
  #allocation2 [shape = 'f32[10,10,8]{2,1,0:T(8,128)}', space=vmem, size = 0x14000, scoped, tag = 'scratch operand']
  %s0 = inlined_call_operand.vmem [shape: f32[2,9,9,16], index: 0, kind: input, shape index: {}]
  %s1 = inlined_call_operand.vmem [shape: f32[4,16,8], index: 1, kind: input, shape index: {}]
  %s2 = inlined_call_operand.vmem [shape: f32[1,8], index: 2, kind: input, shape index: {}]
  %s3 = inlined_call_operand.vmem [shape: f32[16,8,4], index: 3, kind: input, shape index: {}]
  %s4 = inlined_call_operand.vmem [shape: f32[1,4], index: 4, kind: input, shape index: {}]
  %s5 = inlined_call_operand.vmem [shape: f32[2,256,4], index: 5, kind: output, shape index: {}]
  %s6 = sld [smem:[#allocation0]]
  $region53: #{unet_block_innermost.1} parent=0
    _
  %s8 = ssub.s32 1, %s6
  %s9 = scalar_select 0, %s8, %s6
  loop: start=0, step=1, limit=4
  $region2: #{unet_block_innermost.1} parent=0 // loop_pre_header
    _
  $region3: #{unet_block_innermost.1} parent=0 // loop_header
    %s11 = sphi 0, %s15
    %p12 = scmp.ge.s32.totalorder %s11, 4
    %s21 = sphi 0, %s23
    %s24 = sphi 0, %s21
    %s25 = sphi 0, %s24
    %s41 = sphi 0, %s25
    %s45 = sphi 0, %s45
    %s47 = sphi 0, %s45
    %s48 = sphi 0, %s47
    %s62 = sphi 0, %s48
    %s66 = sphi 0, %s66
    %s68 = sphi 0, %s66
    %s69 = sphi 0, %s68
    %s83 = sphi 0, %s69
    %s87 = sphi 0, %s87
    %s89 = sphi 0, %s87
    %s90 = sphi 0, %s89
    %s104 = sphi 0, %s90
    %s108 = sphi 0, %s108
    %s110 = sphi 0, %s108
    %s111 = sphi 0, %s110
    %s125 = sphi 0, %s111
    %s131 = sphi 0, %s133
    %s134 = sphi 0, %s131
    %s135 = sphi 0, %s134
    %s151 = sphi 0, %s135
  $region4: #{unet_block_innermost.1} parent=0 // loop_header_branch
    %14 = sbr.rel (%p12) target = $region8
  $region5: #{unet_block_innermost.1} parent=0 // loop_body
    %s16 = ssub.s32 %s11, 1
    %s17 = ssub.s32 %s11, 2
    %s18 = sadd.s32 %s11, 1
    %s19 = ssub.s32 %s11, %s18
    %p20 = scmp.eq.s32.totalorder %s19, 0
    %s22 = sadd.s32 %s21, 1
    %s23 = scalar_select %p20, %s21, %s22
    %p26 = pneg %p20
    %p27 = scmp.eq.s32.totalorder %s11, 1
    %p28 = por %p26, %p27
    %p29 = scmp.ne.s32.totalorder %s21, %s24
    %p30 = scmp.eq.s32.totalorder %s11, 0
    %p31 = por %p29, %p30
    %p32 = scmp.ne.s32.totalorder %s21, %s24
    %p33 = scmp.eq.s32.totalorder %s16, 1
    %p34 = por %p32, %p33
    %p35 = scmp.ne.s32.totalorder %s24, %s25
    %p36 = scmp.eq.s32.totalorder %s16, 0
    %p37 = por %p35, %p36
    %p38 = scmp.ne.s32.totalorder %s24, %s25
    %p39 = scmp.eq.s32.totalorder %s17, 1
    %p40 = por %p38, %p39
    %p42 = scmp.ne.s32.totalorder %s25, %s41
    %p43 = scmp.eq.s32.totalorder %s17, 0
    %p44 = por %p42, %p43
    %s46 = sadd.s32 %s45, 1
    %p49 = scmp.eq.s32.totalorder %s11, 1
    %p50 = scmp.ne.s32.totalorder %s45, %s47
    %p51 = scmp.eq.s32.totalorder %s11, 0
    %p52 = por %p50, %p51
    %p53 = scmp.ne.s32.totalorder %s45, %s47
    %p54 = scmp.eq.s32.totalorder %s16, 1
    %p55 = por %p53, %p54
    %p56 = scmp.ne.s32.totalorder %s47, %s48
    %p57 = scmp.eq.s32.totalorder %s16, 0
    %p58 = por %p56, %p57
    %p59 = scmp.ne.s32.totalorder %s47, %s48
    %p60 = scmp.eq.s32.totalorder %s17, 1
    %p61 = por %p59, %p60
    %p63 = scmp.ne.s32.totalorder %s48, %s62
    %p64 = scmp.eq.s32.totalorder %s17, 0
    %p65 = por %p63, %p64
    %s67 = sadd.s32 %s66, 1
    %p70 = scmp.eq.s32.totalorder %s11, 1
    %p71 = scmp.ne.s32.totalorder %s66, %s68
    %p72 = scmp.eq.s32.totalorder %s11, 0
    %p73 = por %p71, %p72
    %p74 = scmp.ne.s32.totalorder %s66, %s68
    %p75 = scmp.eq.s32.totalorder %s16, 1
    %p76 = por %p74, %p75
    %p77 = scmp.ne.s32.totalorder %s68, %s69
    %p78 = scmp.eq.s32.totalorder %s16, 0
    %p79 = por %p77, %p78
    %p80 = scmp.ne.s32.totalorder %s68, %s69
    %p81 = scmp.eq.s32.totalorder %s17, 1
    %p82 = por %p80, %p81
    %p84 = scmp.ne.s32.totalorder %s69, %s83
    %p85 = scmp.eq.s32.totalorder %s17, 0
    %p86 = por %p84, %p85
    %s88 = sadd.s32 %s87, 1
    %p91 = scmp.eq.s32.totalorder %s11, 1
    %p92 = scmp.ne.s32.totalorder %s87, %s89
    %p93 = scmp.eq.s32.totalorder %s11, 0
    %p94 = por %p92, %p93
    %p95 = scmp.ne.s32.totalorder %s87, %s89
    %p96 = scmp.eq.s32.totalorder %s16, 1
    %p97 = por %p95, %p96
    %p98 = scmp.ne.s32.totalorder %s89, %s90
    %p99 = scmp.eq.s32.totalorder %s16, 0
    %p100 = por %p98, %p99
    %p101 = scmp.ne.s32.totalorder %s89, %s90
    %p102 = scmp.eq.s32.totalorder %s17, 1
    %p103 = por %p101, %p102
    %p105 = scmp.ne.s32.totalorder %s90, %s104
    %p106 = scmp.eq.s32.totalorder %s17, 0
    %p107 = por %p105, %p106
    %s109 = sadd.s32 %s108, 1
    %p112 = scmp.eq.s32.totalorder %s11, 1
    %p113 = scmp.ne.s32.totalorder %s108, %s110
    %p114 = scmp.eq.s32.totalorder %s11, 0
    %p115 = por %p113, %p114
    %p116 = scmp.ne.s32.totalorder %s108, %s110
    %p117 = scmp.eq.s32.totalorder %s16, 1
    %p118 = por %p116, %p117
    %p119 = scmp.ne.s32.totalorder %s110, %s111
    %p120 = scmp.eq.s32.totalorder %s16, 0
    %p121 = por %p119, %p120
    %p122 = scmp.ne.s32.totalorder %s110, %s111
    %p123 = scmp.eq.s32.totalorder %s17, 1
    %p124 = por %p122, %p123
    %p126 = scmp.ne.s32.totalorder %s111, %s125
    %p127 = scmp.eq.s32.totalorder %s17, 0
    %p128 = por %p126, %p127
    %s129 = ssub.s32 %s11, %s18
    %p130 = scmp.eq.s32.totalorder %s129, 0
    %s132 = sadd.s32 %s131, 1
    %s133 = scalar_select %p130, %s131, %s132
    %p136 = pneg %p130
    %p137 = scmp.eq.s32.totalorder %s11, 1
    %p138 = por %p136, %p137
    %p139 = scmp.ne.s32.totalorder %s131, %s134
    %p140 = scmp.eq.s32.totalorder %s11, 0
    %p141 = por %p139, %p140
    %p142 = scmp.ne.s32.totalorder %s131, %s134
    %p143 = scmp.eq.s32.totalorder %s16, 1
    %p144 = por %p142, %p143
    %p145 = scmp.ne.s32.totalorder %s134, %s135
    %p146 = scmp.eq.s32.totalorder %s16, 0
    %p147 = por %p145, %p146
    %p148 = scmp.ne.s32.totalorder %s134, %s135
    %p149 = scmp.eq.s32.totalorder %s17, 1
    %p150 = por %p148, %p149
    %p152 = scmp.ne.s32.totalorder %s135, %s151
    %p153 = scmp.eq.s32.totalorder %s17, 0
    %p154 = por %p152, %p153
    %p155 = scmp.le.s32.totalorder 1, %s11
    %p156 = scmp.lt.s32.totalorder %s11, 3
    %p157 = pnand %p155, %p156
    %p158 = pneg %p157
    // Predicated region
    $region9: #{unet_block_innermost.1} parent=5 // pred_check
      _
    $region10: #{unet_block_innermost.1} parent=5 // pred_check_branch
      %160 = sbr.rel (%p157) target = $region12
    $region11: #{unet_block_innermost.1} parent=5 // pred_region
      %s161 = ssub.s32 %s11, 1
      // Predicated region
      $region13: #{unet_block_innermost.1} parent=11 // pred_check
        %p162 = pneg %p58
      $region14: #{unet_block_innermost.1} parent=11 // pred_check_branch
        %164 = sbr.rel (%p162) target = $region16
      $region15: #{unet_block_innermost.1} parent=11 // pred_region
        _
      $region16: #{unet_block_innermost.1} parent=11 // pred_fallthru
        _
      // Predicated region
      $region17: #{unet_block_innermost.1} parent=11 // pred_check
        %p165 = pneg %p79
      $region18: #{unet_block_innermost.1} parent=11 // pred_check_branch
        %167 = sbr.rel (%p165) target = $region20
      $region19: #{unet_block_innermost.1} parent=11 // pred_region
        _
      $region20: #{unet_block_innermost.1} parent=11 // pred_fallthru
        _
      // Predicated region
      $region21: #{unet_block_innermost.1} parent=11 // pred_check
        %p168 = pneg %p100
      $region22: #{unet_block_innermost.1} parent=11 // pred_check_branch
        %170 = sbr.rel (%p168) target = $region24
      $region23: #{unet_block_innermost.1} parent=11 // pred_region
        _
      $region24: #{unet_block_innermost.1} parent=11 // pred_fallthru
        _
      // Predicated region
      $region25: #{unet_block_innermost.1} parent=11 // pred_check
        %p171 = pneg %p121
      $region26: #{unet_block_innermost.1} parent=11 // pred_check_branch
        %173 = sbr.rel (%p171) target = $region28
      $region27: #{unet_block_innermost.1} parent=11 // pred_region
        _
      $region28: #{unet_block_innermost.1} parent=11 // pred_fallthru
        _
    $region12: #{unet_block_innermost.1} parent=5 // pred_fallthru
      _
    %p174 = scmp.lt.s32.totalorder %s11, 2
    // Predicated region
    $region29: #{unet_block_innermost.1} parent=5 // pred_check
      %p175 = pneg %p174
    $region30: #{unet_block_innermost.1} parent=5 // pred_check_branch
      %177 = sbr.rel (%p175) target = $region32
    $region31: #{unet_block_innermost.1} parent=5 // pred_region
      // Predicated region
      $region33: #{unet_block_innermost.1} parent=31 // pred_check
        %p178 = pneg %p31
      $region34: #{unet_block_innermost.1} parent=31 // pred_check_branch
        %180 = sbr.rel (%p178) target = $region36
      $region35: #{unet_block_innermost.1} parent=31 // pred_region
        %p181 = scmp.lt.s32.totalorder %s11, 1
        %s182 = scalar_select %p181, %s11, 1
        %s183 = smul.addr %s182, 18
        %s184 = smul.addr %s183, 8
        %s185 = scalar_lea.vmem %s0, %s184
      $region36: #{unet_block_innermost.1} parent=31 // pred_fallthru
        _
    $region32: #{unet_block_innermost.1} parent=5 // pred_fallthru
      _
    %p186 = scmp.le.s32.totalorder 1, %s11
    %p187 = scmp.lt.s32.totalorder %s11, 3
    %p188 = pnand %p186, %p187
    %p189 = pneg %p188
    // Predicated region
    $region37: #{unet_block_innermost.1} parent=5 // pred_check
      _
    $region38: #{unet_block_innermost.1} parent=5 // pred_check_branch
      %191 = sbr.rel (%p188) target = $region40
    $region39: #{unet_block_innermost.1} parent=5 // pred_region
      %s192 = ssub.s32 %s11, 1
      %p193 = scmp.lt.s32.totalorder %s16, 1
      %s194 = scalar_select %p193, %s16, 1
      %s195 = smul.addr %s194, 18
      %s196 = smul.addr %s195, 8
      %s197 = scalar_lea.vmem %s0, %s196
      %p198 = pneg %p37
      %p199 = pneg %p34
      %p200 = pneg %p58
      %p201 = pneg %p55
      %p202 = pneg %p79
      %p203 = pneg %p76
      %p204 = pneg %p100
      %p205 = pneg %p97
      %p206 = pneg %p121
      %p207 = pneg %p118
      %p208 = pneg %p147
      %p209 = pneg %p144
      %p210 = scmp.lt.s32.totalorder %s16, 1
      %s211 = scalar_select %p210, %s16, 1
      %s212 = smul.addr %s211, 32
      %s213 = smul.addr %s212, 8
      %s214 = scalar_lea.vmem %s5, %s213
      %p215 = scmp.lt.s32.totalorder %s16, 1
      %s216 = scalar_select %p215, %s16, 1
      %s217 = smul.addr %s216, 18
      %s218 = smul.addr %s217, 8
      %s219 = scalar_lea.vmem %s0, %s218
      %p220 = scmp.lt.s32.totalorder %s16, 1
      %s221 = scalar_select %p220, %s16, 1
      %s222 = smul.addr %s221, 32
      %s223 = smul.addr %s222, 8
      %s224 = scalar_lea.vmem %s5, %s223
      %v225 = vld [vmem:[%s219] sm:$0xff]
      %v226 = vld [vmem:[%s219 + $0x10] sm:$0xff]
      %v227 = vld [vmem:[%s219 + $0x20] sm:$0xff]
      %v228 = vld [vmem:[%s219 + $0x30] sm:$0xff]
      %v229 = vld [vmem:[%s219 + $0x40] sm:$0xff]
      %v230 = vld [vmem:[%s219 + $0x50] sm:$0xff]
      %v231 = vld [vmem:[%s219 + $0x60] sm:$0xff]
      %v232 = vld [vmem:[%s219 + $0x70] sm:$0xff]
      %v233 = vld [vmem:[%s1] sm:$0xff]
      %v234 = vld [vmem:[%s1 + $0x8] sm:$0xff]
      %v235 = vld [vmem:[%s219 + $0x1] sm:$0xff]
      %v236 = vld [vmem:[%s219 + $0x11] sm:$0xff]
      %v237 = vld [vmem:[%s219 + $0x21] sm:$0xff]
      %v238 = vld [vmem:[%s219 + $0x31] sm:$0xff]
      %v239 = vld [vmem:[%s219 + $0x41] sm:$0xff]
      %v240 = vld [vmem:[%s219 + $0x51] sm:$0xff]
      %v241 = vld [vmem:[%s219 + $0x61] sm:$0xff]
      %v242 = vld [vmem:[%s219 + $0x71] sm:$0xff]
      %s243 = scalar_lea.vmem %s1, 16
      %v244 = vld [vmem:[%s243] sm:$0xff]
      %v245 = vld [vmem:[%s243 + $0x8] sm:$0xff]
      %vm246 = vcmask 130048
      %v248 = vsel %vm246, %v235, 0
      %v251 = vsel %vm246, %v236, 0
      %v254 = vsel %vm246, %v237, 0
      %v257 = vsel %vm246, %v238, 0
      %v260 = vsel %vm246, %v239, 0
      %v263 = vsel %vm246, %v240, 0
      %v266 = vsel %vm246, %v241, 0
      %v269 = vsel %vm246, %v242, 0
      %271 = vmatpush.msra.mxu0 0.0
      %272 = vmatpush.msra.mxu0 0.0
      %273 = vmatpush.msra.mxu0 0.0
      %274 = vmatpush.msra.mxu0 0.0
      %275 = vmatpush.msra.mxu0 0.0
      %276 = vmatpush.msra.mxu0 0.0
      %277 = vmatpush.msra.mxu0 0.0
      %278 = vmatpush.msra.mxu0 0.0
      %279 = vmatpush.msra.mxu0 0.0
      %280 = vmatpush.msra.mxu0 0.0
      %281 = vmatpush.msra.mxu0 0.0
      %282 = vmatpush.msra.mxu0 0.0
      %283 = vmatpush.msra.mxu0 0.0
      %284 = vmatpush.msra.mxu0 0.0
      %285 = vmatpush.msra.mxu0 %v245
      %286 = vmatpush.msra.mxu0 %v244
      %287 = vmatmul.f32.gmra.mxu0 %v248
      %v288 = vpop.f32.mrf.mxu0
      %v289 = vadd.f32 0.0, %v288
      %290 = vmatmul.f32.gmra.mxu0 %v251
      %v291 = vpop.f32.mrf.mxu0
      %v292 = vadd.f32 0.0, %v291
      %293 = vmatmul.f32.gmra.mxu0 %v254
      %v294 = vpop.f32.mrf.mxu0
      %v295 = vadd.f32 0.0, %v294
      %296 = vmatmul.f32.gmra.mxu0 %v257
      %v297 = vpop.f32.mrf.mxu0
      %v298 = vadd.f32 0.0, %v297
      %299 = vmatmul.f32.gmra.mxu0 %v260
      %v300 = vpop.f32.mrf.mxu0
      %v301 = vadd.f32 0.0, %v300
      %302 = vmatmul.f32.gmra.mxu0 %v263
      %v303 = vpop.f32.mrf.mxu0
      %v304 = vadd.f32 0.0, %v303
      %305 = vmatmul.f32.gmra.mxu0 %v266
      %v306 = vpop.f32.mrf.mxu0
      %v307 = vadd.f32 0.0, %v306
      %308 = vmatmul.f32.gmra.mxu0 %v269
      %v309 = vpop.f32.mrf.mxu0
      %v310 = vadd.f32 0.0, %v309
      %311 = vdwg.mxu0
      %v313 = vsel %vm246, %v225, 0
      %v316 = vsel %vm246, %v226, 0
      %v319 = vsel %vm246, %v227, 0
      %v322 = vsel %vm246, %v228, 0
      %v325 = vsel %vm246, %v229, 0
      %v328 = vsel %vm246, %v230, 0
      %v331 = vsel %vm246, %v231, 0
      %v334 = vsel %vm246, %v232, 0
      %336 = vmatpush.msra.mxu0 0.0
      %337 = vmatpush.msra.mxu0 0.0
      %338 = vmatpush.msra.mxu0 0.0
      %339 = vmatpush.msra.mxu0 0.0
      %340 = vmatpush.msra.mxu0 0.0
      %341 = vmatpush.msra.mxu0 0.0
      %342 = vmatpush.msra.mxu0 0.0
      %343 = vmatpush.msra.mxu0 0.0
      %344 = vmatpush.msra.mxu0 0.0
      %345 = vmatpush.msra.mxu0 0.0
      %346 = vmatpush.msra.mxu0 0.0
      %347 = vmatpush.msra.mxu0 0.0
      %348 = vmatpush.msra.mxu0 0.0
      %349 = vmatpush.msra.mxu0 0.0
      %350 = vmatpush.msra.mxu0 %v234
      %351 = vmatpush.msra.mxu0 %v233
      %352 = vmatmul.f32.gmra.mxu0 %v313
      %v353 = vpop.f32.mrf.mxu0
      %v354 = vadd.f32 %v289, %v353
      %355 = vmatmul.f32.gmra.mxu0 %v316
      %v356 = vpop.f32.mrf.mxu0
      %v357 = vadd.f32 %v292, %v356
      %358 = vmatmul.f32.gmra.mxu0 %v319
      %v359 = vpop.f32.mrf.mxu0
      %v360 = vadd.f32 %v295, %v359
      %361 = vmatmul.f32.gmra.mxu0 %v322
      %v362 = vpop.f32.mrf.mxu0
      %v363 = vadd.f32 %v298, %v362
      %364 = vmatmul.f32.gmra.mxu0 %v325
      %v365 = vpop.f32.mrf.mxu0
      %v366 = vadd.f32 %v301, %v365
      %367 = vmatmul.f32.gmra.mxu0 %v328
      %v368 = vpop.f32.mrf.mxu0
      %v369 = vadd.f32 %v304, %v368
      %370 = vmatmul.f32.gmra.mxu0 %v331
      %v371 = vpop.f32.mrf.mxu0
      %v372 = vadd.f32 %v307, %v371
      %373 = vmatmul.f32.gmra.mxu0 %v334
      %v374 = vpop.f32.mrf.mxu0
      %v375 = vadd.f32 %v310, %v374
      %376 = vdwg.mxu0
      %s377 = scalar_lea.vmem %s219, 16
      %v378 = vld [vmem:[%s377] sm:$0xff]
      %v379 = vld [vmem:[%s377 + $0x10] sm:$0xff]
      %v380 = vld [vmem:[%s377 + $0x20] sm:$0xff]
      %v381 = vld [vmem:[%s377 + $0x30] sm:$0xff]
      %v382 = vld [vmem:[%s377 + $0x40] sm:$0xff]
      %v383 = vld [vmem:[%s377 + $0x50] sm:$0xff]
      %v384 = vld [vmem:[%s377 + $0x60] sm:$0xff]
      %v385 = vld [vmem:[%s377 + $0x70] sm:$0xff]
      %s386 = scalar_lea.vmem %s1, 32
      %v387 = vld [vmem:[%s386] sm:$0xff]
      %v388 = vld [vmem:[%s386 + $0x8] sm:$0xff]
      %v390 = vsel %vm246, %v378, 0
      %v393 = vsel %vm246, %v379, 0
      %v396 = vsel %vm246, %v380, 0
      %v399 = vsel %vm246, %v381, 0
      %v402 = vsel %vm246, %v382, 0
      %v405 = vsel %vm246, %v383, 0
      %v408 = vsel %vm246, %v384, 0
      %v411 = vsel %vm246, %v385, 0
      %413 = vmatpush.msra.mxu0 0.0
      %414 = vmatpush.msra.mxu0 0.0
      %415 = vmatpush.msra.mxu0 0.0
      %416 = vmatpush.msra.mxu0 0.0
      %417 = vmatpush.msra.mxu0 0.0
      %418 = vmatpush.msra.mxu0 0.0
      %419 = vmatpush.msra.mxu0 0.0
      %420 = vmatpush.msra.mxu0 0.0
      %421 = vmatpush.msra.mxu0 0.0
      %422 = vmatpush.msra.mxu0 0.0
      %423 = vmatpush.msra.mxu0 0.0
      %424 = vmatpush.msra.mxu0 0.0
      %425 = vmatpush.msra.mxu0 0.0
      %426 = vmatpush.msra.mxu0 0.0
      %427 = vmatpush.msra.mxu0 %v388
      %428 = vmatpush.msra.mxu0 %v387
      %429 = vmatmul.f32.gmra.mxu0 %v390
      %v430 = vpop.f32.mrf.mxu0
      %v431 = vadd.f32 0.0, %v430
      %432 = vmatmul.f32.gmra.mxu0 %v393
      %v433 = vpop.f32.mrf.mxu0
      %v434 = vadd.f32 0.0, %v433
      %435 = vmatmul.f32.gmra.mxu0 %v396
      %v436 = vpop.f32.mrf.mxu0
      %v437 = vadd.f32 0.0, %v436
      %438 = vmatmul.f32.gmra.mxu0 %v399
      %v439 = vpop.f32.mrf.mxu0
      %v440 = vadd.f32 0.0, %v439
      %441 = vmatmul.f32.gmra.mxu0 %v402
      %v442 = vpop.f32.mrf.mxu0
      %v443 = vadd.f32 0.0, %v442
      %444 = vmatmul.f32.gmra.mxu0 %v405
      %v445 = vpop.f32.mrf.mxu0
      %v446 = vadd.f32 0.0, %v445
      %447 = vmatmul.f32.gmra.mxu0 %v408
      %v448 = vpop.f32.mrf.mxu0
      %v449 = vadd.f32 0.0, %v448
      %450 = vmatmul.f32.gmra.mxu0 %v411
      %v451 = vpop.f32.mrf.mxu0
      %v452 = vadd.f32 0.0, %v451
      %453 = vdwg.mxu0
      %v454 = vadd.f32 %v354, %v431
      %v455 = vadd.f32 %v357, %v434
      %v456 = vadd.f32 %v360, %v437
      %v457 = vadd.f32 %v363, %v440
      %v458 = vadd.f32 %v366, %v443
      %v459 = vadd.f32 %v369, %v446
      %v460 = vadd.f32 %v372, %v449
      %v461 = vadd.f32 %v375, %v452
      %v462 = vld [vmem:[%s377 + $0x1] sm:$0xff]
      %v463 = vld [vmem:[%s377 + $0x11] sm:$0xff]
      %v464 = vld [vmem:[%s377 + $0x21] sm:$0xff]
      %v465 = vld [vmem:[%s377 + $0x31] sm:$0xff]
      %v466 = vld [vmem:[%s377 + $0x41] sm:$0xff]
      %v467 = vld [vmem:[%s377 + $0x51] sm:$0xff]
      %v468 = vld [vmem:[%s377 + $0x61] sm:$0xff]
      %v469 = vld [vmem:[%s377 + $0x71] sm:$0xff]
      %s470 = scalar_lea.vmem %s1, 48
      %v471 = vld [vmem:[%s470] sm:$0xff]
      %v472 = vld [vmem:[%s470 + $0x8] sm:$0xff]
      %v474 = vsel %vm246, %v462, 0
      %v477 = vsel %vm246, %v463, 0
      %v480 = vsel %vm246, %v464, 0
      %v483 = vsel %vm246, %v465, 0
      %v486 = vsel %vm246, %v466, 0
      %v489 = vsel %vm246, %v467, 0
      %v492 = vsel %vm246, %v468, 0
      %v495 = vsel %vm246, %v469, 0
      %497 = vmatpush.msra.mxu0 0.0
      %498 = vmatpush.msra.mxu0 0.0
      %499 = vmatpush.msra.mxu0 0.0
      %500 = vmatpush.msra.mxu0 0.0
      %501 = vmatpush.msra.mxu0 0.0
      %502 = vmatpush.msra.mxu0 0.0
      %503 = vmatpush.msra.mxu0 0.0
      %504 = vmatpush.msra.mxu0 0.0
      %505 = vmatpush.msra.mxu0 0.0
      %506 = vmatpush.msra.mxu0 0.0
      %507 = vmatpush.msra.mxu0 0.0
      %508 = vmatpush.msra.mxu0 0.0
      %509 = vmatpush.msra.mxu0 0.0
      %510 = vmatpush.msra.mxu0 0.0
      %511 = vmatpush.msra.mxu0 %v472
      %512 = vmatpush.msra.mxu0 %v471
      %513 = vmatmul.f32.gmra.mxu0 %v474
      %v514 = vpop.f32.mrf.mxu0
      %v515 = vadd.f32 0.0, %v514
      %516 = vmatmul.f32.gmra.mxu0 %v477
      %v517 = vpop.f32.mrf.mxu0
      %v518 = vadd.f32 0.0, %v517
      %519 = vmatmul.f32.gmra.mxu0 %v480
      %v520 = vpop.f32.mrf.mxu0
      %v521 = vadd.f32 0.0, %v520
      %522 = vmatmul.f32.gmra.mxu0 %v483
      %v523 = vpop.f32.mrf.mxu0
      %v524 = vadd.f32 0.0, %v523
      %525 = vmatmul.f32.gmra.mxu0 %v486
      %v526 = vpop.f32.mrf.mxu0
      %v527 = vadd.f32 0.0, %v526
      %528 = vmatmul.f32.gmra.mxu0 %v489
      %v529 = vpop.f32.mrf.mxu0
      %v530 = vadd.f32 0.0, %v529
      %531 = vmatmul.f32.gmra.mxu0 %v492
      %v532 = vpop.f32.mrf.mxu0
      %v533 = vadd.f32 0.0, %v532
      %534 = vmatmul.f32.gmra.mxu0 %v495
      %v535 = vpop.f32.mrf.mxu0
      %v536 = vadd.f32 0.0, %v535
      %537 = vdwg.mxu0
      %v538 = vadd.f32 %v454, %v515
      %v539 = vadd.f32 %v455, %v518
      %v540 = vadd.f32 %v456, %v521
      %v541 = vadd.f32 %v457, %v524
      %v542 = vadd.f32 %v458, %v527
      %v543 = vadd.f32 %v459, %v530
      %v544 = vadd.f32 %v460, %v533
      %v545 = vadd.f32 %v461, %v536
      %v546 = vld [vmem:[%s2] sm:$0x1]
      %v548 = vperm.slane %v546, 0
      %v550 = vadd.f32 %v538, %v548
      %v551 = vadd.f32 %v539, %v548
      %v552 = vadd.f32 %v540, %v548
      %v553 = vadd.f32 %v541, %v548
      %v554 = vadd.f32 %v542, %v548
      %v555 = vadd.f32 %v543, %v548
      %v556 = vadd.f32 %v544, %v548
      %v557 = vadd.f32 %v545, %v548
      %v558 = vmax.f32 %v550, 0.0
      %v559 = vmax.f32 %v551, 0.0
      %v560 = vmax.f32 %v552, 0.0
      %v561 = vmax.f32 %v553, 0.0
      %v562 = vmax.f32 %v554, 0.0
      %v563 = vmax.f32 %v555, 0.0
      %v564 = vmax.f32 %v556, 0.0
      %v565 = vmax.f32 %v557, 0.0
      %vm566 = vcmask 64512
      %567 = vst.msk [vmem:[#allocation2] sm:$0xff] %vm566, 0.0
      %vm568 = vcmask 58368
      %569 = vst.msk [vmem:[#allocation2 + $0x8] sm:$0x3] %vm568, 0.0
      %570 = vst.msk [vmem:[#allocation2 + $0x10] sm:$0xff] %vm566, 0.0
      %571 = vst.msk [vmem:[#allocation2 + $0x18] sm:$0x3] %vm568, 0.0
      %572 = vst.msk [vmem:[#allocation2 + $0x20] sm:$0xff] %vm566, 0.0
      %573 = vst.msk [vmem:[#allocation2 + $0x28] sm:$0x3] %vm568, 0.0
      %574 = vst.msk [vmem:[#allocation2 + $0x30] sm:$0xff] %vm566, 0.0
      %575 = vst.msk [vmem:[#allocation2 + $0x38] sm:$0x3] %vm568, 0.0
      %576 = vst.msk [vmem:[#allocation2 + $0x40] sm:$0xff] %vm566, 0.0
      %577 = vst.msk [vmem:[#allocation2 + $0x48] sm:$0x3] %vm568, 0.0
      %578 = vst.msk [vmem:[#allocation2 + $0x50] sm:$0xff] %vm566, 0.0
      %579 = vst.msk [vmem:[#allocation2 + $0x58] sm:$0x3] %vm568, 0.0
      %580 = vst.msk [vmem:[#allocation2 + $0x60] sm:$0xff] %vm566, 0.0
      %581 = vst.msk [vmem:[#allocation2 + $0x68] sm:$0x3] %vm568, 0.0
      %582 = vst.msk [vmem:[#allocation2 + $0x70] sm:$0xff] %vm566, 0.0
      %583 = vst.msk [vmem:[#allocation2 + $0x78] sm:$0x3] %vm568, 0.0
      %584 = vst.msk [vmem:[#allocation2 + $0x80] sm:$0xff] %vm566, 0.0
      %585 = vst.msk [vmem:[#allocation2 + $0x88] sm:$0x3] %vm568, 0.0
      %586 = vst.msk [vmem:[#allocation2 + $0x90] sm:$0xff] %vm566, 0.0
      %587 = vst.msk [vmem:[#allocation2 + $0x98] sm:$0x3] %vm568, 0.0
      %s588 = scalar_lea.vmem [#allocation2], 16
      %589 = vst.msk [vmem:[%s588 + $0x1] sm:$0xff] %vm566, %v558
      %590 = vst.msk [vmem:[%s588 + $0x11] sm:$0xff] %vm566, %v559
      %591 = vst.msk [vmem:[%s588 + $0x21] sm:$0xff] %vm566, %v560
      %592 = vst.msk [vmem:[%s588 + $0x31] sm:$0xff] %vm566, %v561
      %593 = vst.msk [vmem:[%s588 + $0x41] sm:$0xff] %vm566, %v562
      %594 = vst.msk [vmem:[%s588 + $0x51] sm:$0xff] %vm566, %v563
      %595 = vst.msk [vmem:[%s588 + $0x61] sm:$0xff] %vm566, %v564
      %596 = vst.msk [vmem:[%s588 + $0x71] sm:$0xff] %vm566, %v565
      %v597 = vld [vmem:[#allocation2] sm:$0xff]
      %v598 = vld [vmem:[#allocation2 + $0x10] sm:$0xff]
      %v599 = vld [vmem:[#allocation2 + $0x20] sm:$0xff]
      %v600 = vld [vmem:[#allocation2 + $0x30] sm:$0xff]
      %v601 = vld [vmem:[#allocation2 + $0x40] sm:$0xff]
      %v602 = vld [vmem:[#allocation2 + $0x50] sm:$0xff]
      %v603 = vld [vmem:[#allocation2 + $0x60] sm:$0xff]
      %v604 = vld [vmem:[#allocation2 + $0x70] sm:$0xff]
      %v605 = vld [vmem:[%s3] sm:$0xff]
      %v606 = vld [vmem:[#allocation2 + $0x1] sm:$0xff]
      %v607 = vld [vmem:[#allocation2 + $0x11] sm:$0xff]
      %v608 = vld [vmem:[#allocation2 + $0x21] sm:$0xff]
      %v609 = vld [vmem:[#allocation2 + $0x31] sm:$0xff]
      %v610 = vld [vmem:[#allocation2 + $0x41] sm:$0xff]
      %v611 = vld [vmem:[#allocation2 + $0x51] sm:$0xff]
      %v612 = vld [vmem:[#allocation2 + $0x61] sm:$0xff]
      %v613 = vld [vmem:[#allocation2 + $0x71] sm:$0xff]
      %s614 = scalar_lea.vmem %s3, 8
      %v615 = vld [vmem:[%s614] sm:$0xff]
      %v617 = vsel %vm566, %v606, 0
      %v620 = vsel %vm566, %v607, 0
      %v623 = vsel %vm566, %v608, 0
      %v626 = vsel %vm566, %v609, 0
      %v629 = vsel %vm566, %v610, 0
      %v632 = vsel %vm566, %v611, 0
      %v635 = vsel %vm566, %v612, 0
      %v638 = vsel %vm566, %v613, 0
      %640 = vmatpush.msra.mxu0 0.0
      %641 = vmatpush.msra.mxu0 0.0
      %642 = vmatpush.msra.mxu0 0.0
      %643 = vmatpush.msra.mxu0 0.0
      %644 = vmatpush.msra.mxu0 0.0
      %645 = vmatpush.msra.mxu0 0.0
      %646 = vmatpush.msra.mxu0 0.0
      %647 = vmatpush.msra.mxu0 0.0
      %648 = vmatpush.msra.mxu0 0.0
      %649 = vmatpush.msra.mxu0 0.0
      %650 = vmatpush.msra.mxu0 0.0
      %651 = vmatpush.msra.mxu0 0.0
      %652 = vmatpush.msra.mxu0 0.0
      %653 = vmatpush.msra.mxu0 0.0
      %654 = vmatpush.msra.mxu0 0.0
      %655 = vmatpush.msra.mxu0 %v615
      %656 = vmatmul.f32.gmra.mxu0 %v617
      %v657 = vpop.f32.mrf.mxu0
      %v658 = vadd.f32 0.0, %v657
      %659 = vmatmul.f32.gmra.mxu0 %v620
      %v660 = vpop.f32.mrf.mxu0
      %v661 = vadd.f32 0.0, %v660
      %662 = vmatmul.f32.gmra.mxu0 %v623
      %v663 = vpop.f32.mrf.mxu0
      %v664 = vadd.f32 0.0, %v663
      %665 = vmatmul.f32.gmra.mxu0 %v626
      %v666 = vpop.f32.mrf.mxu0
      %v667 = vadd.f32 0.0, %v666
      %668 = vmatmul.f32.gmra.mxu0 %v629
      %v669 = vpop.f32.mrf.mxu0
      %v670 = vadd.f32 0.0, %v669
      %671 = vmatmul.f32.gmra.mxu0 %v632
      %v672 = vpop.f32.mrf.mxu0
      %v673 = vadd.f32 0.0, %v672
      %674 = vmatmul.f32.gmra.mxu0 %v635
      %v675 = vpop.f32.mrf.mxu0
      %v676 = vadd.f32 0.0, %v675
      %677 = vmatmul.f32.gmra.mxu0 %v638
      %v678 = vpop.f32.mrf.mxu0
      %v679 = vadd.f32 0.0, %v678
      %680 = vdwg.mxu0
      %v682 = vsel %vm566, %v597, 0
      %v685 = vsel %vm566, %v598, 0
      %v688 = vsel %vm566, %v599, 0
      %v691 = vsel %vm566, %v600, 0
      %v694 = vsel %vm566, %v601, 0
      %v697 = vsel %vm566, %v602, 0
      %v700 = vsel %vm566, %v603, 0
      %v703 = vsel %vm566, %v604, 0
      %705 = vmatpush.msra.mxu0 0.0
      %706 = vmatpush.msra.mxu0 0.0
      %707 = vmatpush.msra.mxu0 0.0
      %708 = vmatpush.msra.mxu0 0.0
      %709 = vmatpush.msra.mxu0 0.0
      %710 = vmatpush.msra.mxu0 0.0
      %711 = vmatpush.msra.mxu0 0.0
      %712 = vmatpush.msra.mxu0 0.0
      %713 = vmatpush.msra.mxu0 0.0
      %714 = vmatpush.msra.mxu0 0.0
      %715 = vmatpush.msra.mxu0 0.0
      %716 = vmatpush.msra.mxu0 0.0
      %717 = vmatpush.msra.mxu0 0.0
      %718 = vmatpush.msra.mxu0 0.0
      %719 = vmatpush.msra.mxu0 0.0
      %720 = vmatpush.msra.mxu0 %v605
      %721 = vmatmul.f32.gmra.mxu0 %v682
      %v722 = vpop.f32.mrf.mxu0
      %v723 = vadd.f32 %v658, %v722
      %724 = vmatmul.f32.gmra.mxu0 %v685
      %v725 = vpop.f32.mrf.mxu0
      %v726 = vadd.f32 %v661, %v725
      %727 = vmatmul.f32.gmra.mxu0 %v688
      %v728 = vpop.f32.mrf.mxu0
      %v729 = vadd.f32 %v664, %v728
      %730 = vmatmul.f32.gmra.mxu0 %v691
      %v731 = vpop.f32.mrf.mxu0
      %v732 = vadd.f32 %v667, %v731
      %733 = vmatmul.f32.gmra.mxu0 %v694
      %v734 = vpop.f32.mrf.mxu0
      %v735 = vadd.f32 %v670, %v734
      %736 = vmatmul.f32.gmra.mxu0 %v697
      %v737 = vpop.f32.mrf.mxu0
      %v738 = vadd.f32 %v673, %v737
      %739 = vmatmul.f32.gmra.mxu0 %v700
      %v740 = vpop.f32.mrf.mxu0
      %v741 = vadd.f32 %v676, %v740
      %742 = vmatmul.f32.gmra.mxu0 %v703
      %v743 = vpop.f32.mrf.mxu0
      %v744 = vadd.f32 %v679, %v743
      %745 = vdwg.mxu0
      %v746 = vld [vmem:[%s588] sm:$0xff]
      %v747 = vld [vmem:[%s588 + $0x10] sm:$0xff]
      %v748 = vld [vmem:[%s588 + $0x20] sm:$0xff]
      %v749 = vld [vmem:[%s588 + $0x30] sm:$0xff]
      %v750 = vld [vmem:[%s588 + $0x40] sm:$0xff]
      %v751 = vld [vmem:[%s588 + $0x50] sm:$0xff]
      %v752 = vld [vmem:[%s588 + $0x60] sm:$0xff]
      %v753 = vld [vmem:[%s588 + $0x70] sm:$0xff]
      %s754 = scalar_lea.vmem %s3, 16
      %v755 = vld [vmem:[%s754] sm:$0xff]
      %v757 = vsel %vm566, %v746, 0
      %v760 = vsel %vm566, %v747, 0
      %v763 = vsel %vm566, %v748, 0
      %v766 = vsel %vm566, %v749, 0
      %v769 = vsel %vm566, %v750, 0
      %v772 = vsel %vm566, %v751, 0
      %v775 = vsel %vm566, %v752, 0
      %v778 = vsel %vm566, %v753, 0
      %780 = vmatpush.msra.mxu0 0.0
      %781 = vmatpush.msra.mxu0 0.0
      %782 = vmatpush.msra.mxu0 0.0
      %783 = vmatpush.msra.mxu0 0.0
      %784 = vmatpush.msra.mxu0 0.0
      %785 = vmatpush.msra.mxu0 0.0
      %786 = vmatpush.msra.mxu0 0.0
      %787 = vmatpush.msra.mxu0 0.0
      %788 = vmatpush.msra.mxu0 0.0
      %789 = vmatpush.msra.mxu0 0.0
      %790 = vmatpush.msra.mxu0 0.0
      %791 = vmatpush.msra.mxu0 0.0
      %792 = vmatpush.msra.mxu0 0.0
      %793 = vmatpush.msra.mxu0 0.0
      %794 = vmatpush.msra.mxu0 0.0
      %795 = vmatpush.msra.mxu0 %v755
      %796 = vmatmul.f32.gmra.mxu0 %v757
      %v797 = vpop.f32.mrf.mxu0
      %v798 = vadd.f32 0.0, %v797
      %799 = vmatmul.f32.gmra.mxu0 %v760
      %v800 = vpop.f32.mrf.mxu0
      %v801 = vadd.f32 0.0, %v800
      %802 = vmatmul.f32.gmra.mxu0 %v763
      %v803 = vpop.f32.mrf.mxu0
      %v804 = vadd.f32 0.0, %v803
      %805 = vmatmul.f32.gmra.mxu0 %v766
      %v806 = vpop.f32.mrf.mxu0
      %v807 = vadd.f32 0.0, %v806
      %808 = vmatmul.f32.gmra.mxu0 %v769
      %v809 = vpop.f32.mrf.mxu0
      %v810 = vadd.f32 0.0, %v809
      %811 = vmatmul.f32.gmra.mxu0 %v772
      %v812 = vpop.f32.mrf.mxu0
      %v813 = vadd.f32 0.0, %v812
      %814 = vmatmul.f32.gmra.mxu0 %v775
      %v815 = vpop.f32.mrf.mxu0
      %v816 = vadd.f32 0.0, %v815
      %817 = vmatmul.f32.gmra.mxu0 %v778
      %v818 = vpop.f32.mrf.mxu0
      %v819 = vadd.f32 0.0, %v818
      %820 = vdwg.mxu0
      %v821 = vadd.f32 %v723, %v798
      %v822 = vadd.f32 %v726, %v801
      %v823 = vadd.f32 %v729, %v804
      %v824 = vadd.f32 %v732, %v807
      %v825 = vadd.f32 %v735, %v810
      %v826 = vadd.f32 %v738, %v813
      %v827 = vadd.f32 %v741, %v816
      %v828 = vadd.f32 %v744, %v819
      %v829 = vld [vmem:[%s588 + $0x1] sm:$0xff]
      %v830 = vld [vmem:[%s588 + $0x11] sm:$0xff]
      %v831 = vld [vmem:[%s588 + $0x21] sm:$0xff]
      %v832 = vld [vmem:[%s588 + $0x31] sm:$0xff]
      %v833 = vld [vmem:[%s588 + $0x41] sm:$0xff]
      %v834 = vld [vmem:[%s588 + $0x51] sm:$0xff]
      %v835 = vld [vmem:[%s588 + $0x61] sm:$0xff]
      %v836 = vld [vmem:[%s588 + $0x71] sm:$0xff]
      %s837 = scalar_lea.vmem %s3, 24
      %v838 = vld [vmem:[%s837] sm:$0xff]
      %v840 = vsel %vm566, %v829, 0
      %v843 = vsel %vm566, %v830, 0
      %v846 = vsel %vm566, %v831, 0
      %v849 = vsel %vm566, %v832, 0
      %v852 = vsel %vm566, %v833, 0
      %v855 = vsel %vm566, %v834, 0
      %v858 = vsel %vm566, %v835, 0
      %v861 = vsel %vm566, %v836, 0
      %863 = vmatpush.msra.mxu0 0.0
      %864 = vmatpush.msra.mxu0 0.0
      %865 = vmatpush.msra.mxu0 0.0
      %866 = vmatpush.msra.mxu0 0.0
      %867 = vmatpush.msra.mxu0 0.0
      %868 = vmatpush.msra.mxu0 0.0
      %869 = vmatpush.msra.mxu0 0.0
      %870 = vmatpush.msra.mxu0 0.0
      %871 = vmatpush.msra.mxu0 0.0
      %872 = vmatpush.msra.mxu0 0.0
      %873 = vmatpush.msra.mxu0 0.0
      %874 = vmatpush.msra.mxu0 0.0
      %875 = vmatpush.msra.mxu0 0.0
      %876 = vmatpush.msra.mxu0 0.0
      %877 = vmatpush.msra.mxu0 0.0
      %878 = vmatpush.msra.mxu0 %v838
      %879 = vmatmul.f32.gmra.mxu0 %v840
      %v880 = vpop.f32.mrf.mxu0
      %v881 = vadd.f32 0.0, %v880
      %882 = vmatmul.f32.gmra.mxu0 %v843
      %v883 = vpop.f32.mrf.mxu0
      %v884 = vadd.f32 0.0, %v883
      %885 = vmatmul.f32.gmra.mxu0 %v846
      %v886 = vpop.f32.mrf.mxu0
      %v887 = vadd.f32 0.0, %v886
      %888 = vmatmul.f32.gmra.mxu0 %v849
      %v889 = vpop.f32.mrf.mxu0
      %v890 = vadd.f32 0.0, %v889
      %891 = vmatmul.f32.gmra.mxu0 %v852
      %v892 = vpop.f32.mrf.mxu0
      %v893 = vadd.f32 0.0, %v892
      %894 = vmatmul.f32.gmra.mxu0 %v855
      %v895 = vpop.f32.mrf.mxu0
      %v896 = vadd.f32 0.0, %v895
      %897 = vmatmul.f32.gmra.mxu0 %v858
      %v898 = vpop.f32.mrf.mxu0
      %v899 = vadd.f32 0.0, %v898
      %900 = vmatmul.f32.gmra.mxu0 %v861
      %v901 = vpop.f32.mrf.mxu0
      %v902 = vadd.f32 0.0, %v901
      %903 = vdwg.mxu0
      %v904 = vadd.f32 %v821, %v881
      %v905 = vadd.f32 %v822, %v884
      %v906 = vadd.f32 %v823, %v887
      %v907 = vadd.f32 %v824, %v890
      %v908 = vadd.f32 %v825, %v893
      %v909 = vadd.f32 %v826, %v896
      %v910 = vadd.f32 %v827, %v899
      %v911 = vadd.f32 %v828, %v902
      %v912 = vld [vmem:[%s4] sm:$0x1]
      %v914 = vperm.slane %v912, 0
      %v916 = vadd.f32 %v904, %v914
      %v917 = vadd.f32 %v905, %v914
      %v918 = vadd.f32 %v906, %v914
      %v919 = vadd.f32 %v907, %v914
      %v920 = vadd.f32 %v908, %v914
      %v921 = vadd.f32 %v909, %v914
      %v922 = vadd.f32 %v910, %v914
      %v923 = vadd.f32 %v911, %v914
      %vm924 = vcmask 31744
      %v925 = vsel %vm924, %v916, 0.0
      %v926 = vsel %vm924, %v917, 0.0
      %v927 = vadd.f32 %v925, %v926
      %v928 = vsel %vm924, %v918, 0.0
      %v929 = vadd.f32 %v927, %v928
      %v930 = vsel %vm924, %v919, 0.0
      %v931 = vadd.f32 %v929, %v930
      %v932 = vsel %vm924, %v920, 0.0
      %v933 = vadd.f32 %v931, %v932
      %v934 = vsel %vm924, %v921, 0.0
      %v935 = vadd.f32 %v933, %v934
      %v936 = vsel %vm924, %v922, 0.0
      %v937 = vadd.f32 %v935, %v936
      %v938 = vsel %vm924, %v923, 0.0
      %v939 = vadd.f32 %v937, %v938
      %v940 = vrot.slane %v939, 4
      %v941 = vadd.f32 %v939, %v940
      %v942 = vrot.slane %v941, 2
      %v943 = vadd.f32 %v941, %v942
      %v944 = vrot.slane %v943, 1
      %v945 = vadd.f32 %v943, %v944
      %v946 = vadd.f32 %v945, 0.0
      %s947 = scalar_lea.vmem %s3, 32
      %v948 = vld [vmem:[%s947] sm:$0xff]
      %v949 = vld [vmem:[#allocation2 + $0x2] sm:$0xff]
      %v950 = vld [vmem:[#allocation2 + $0x12] sm:$0xff]
      %v951 = vld [vmem:[#allocation2 + $0x22] sm:$0xff]
      %v952 = vld [vmem:[#allocation2 + $0x32] sm:$0xff]
      %v953 = vld [vmem:[#allocation2 + $0x42] sm:$0xff]
      %v954 = vld [vmem:[#allocation2 + $0x52] sm:$0xff]
      %v955 = vld [vmem:[#allocation2 + $0x62] sm:$0xff]
      %v956 = vld [vmem:[#allocation2 + $0x72] sm:$0xff]
      %s957 = scalar_lea.vmem %s3, 40
      %v958 = vld [vmem:[%s957] sm:$0xff]
      %v960 = vsel %vm566, %v949, 0
      %v963 = vsel %vm566, %v950, 0
      %v966 = vsel %vm566, %v951, 0
      %v969 = vsel %vm566, %v952, 0
      %v972 = vsel %vm566, %v953, 0
      %v975 = vsel %vm566, %v954, 0
      %v978 = vsel %vm566, %v955, 0
      %v981 = vsel %vm566, %v956, 0
      %983 = vmatpush.msra.mxu0 0.0
      %984 = vmatpush.msra.mxu0 0.0
      %985 = vmatpush.msra.mxu0 0.0
      %986 = vmatpush.msra.mxu0 0.0
      %987 = vmatpush.msra.mxu0 0.0
      %988 = vmatpush.msra.mxu0 0.0
      %989 = vmatpush.msra.mxu0 0.0
      %990 = vmatpush.msra.mxu0 0.0
      %991 = vmatpush.msra.mxu0 0.0
      %992 = vmatpush.msra.mxu0 0.0
      %993 = vmatpush.msra.mxu0 0.0
      %994 = vmatpush.msra.mxu0 0.0
      %995 = vmatpush.msra.mxu0 0.0
      %996 = vmatpush.msra.mxu0 0.0
      %997 = vmatpush.msra.mxu0 0.0
      %998 = vmatpush.msra.mxu0 %v958
      %999 = vmatmul.f32.gmra.mxu0 %v960
      %v1000 = vpop.f32.mrf.mxu0
      %v1001 = vadd.f32 0.0, %v1000
      %1002 = vmatmul.f32.gmra.mxu0 %v963
      %v1003 = vpop.f32.mrf.mxu0
      %v1004 = vadd.f32 0.0, %v1003
      %1005 = vmatmul.f32.gmra.mxu0 %v966
      %v1006 = vpop.f32.mrf.mxu0
      %v1007 = vadd.f32 0.0, %v1006
      %1008 = vmatmul.f32.gmra.mxu0 %v969
      %v1009 = vpop.f32.mrf.mxu0
      %v1010 = vadd.f32 0.0, %v1009
      %1011 = vmatmul.f32.gmra.mxu0 %v972
      %v1012 = vpop.f32.mrf.mxu0
      %v1013 = vadd.f32 0.0, %v1012
      %1014 = vmatmul.f32.gmra.mxu0 %v975
      %v1015 = vpop.f32.mrf.mxu0
      %v1016 = vadd.f32 0.0, %v1015
      %1017 = vmatmul.f32.gmra.mxu0 %v978
      %v1018 = vpop.f32.mrf.mxu0
      %v1019 = vadd.f32 0.0, %v1018
      %1020 = vmatmul.f32.gmra.mxu0 %v981
      %v1021 = vpop.f32.mrf.mxu0
      %v1022 = vadd.f32 0.0, %v1021
      %1023 = vdwg.mxu0
      %1024 = vmatpush.msra.mxu0 0.0
      %1025 = vmatpush.msra.mxu0 0.0
      %1026 = vmatpush.msra.mxu0 0.0
      %1027 = vmatpush.msra.mxu0 0.0
      %1028 = vmatpush.msra.mxu0 0.0
      %1029 = vmatpush.msra.mxu0 0.0
      %1030 = vmatpush.msra.mxu0 0.0
      %1031 = vmatpush.msra.mxu0 0.0
      %1032 = vmatpush.msra.mxu0 0.0
      %1033 = vmatpush.msra.mxu0 0.0
      %1034 = vmatpush.msra.mxu0 0.0
      %1035 = vmatpush.msra.mxu0 0.0
      %1036 = vmatpush.msra.mxu0 0.0
      %1037 = vmatpush.msra.mxu0 0.0
      %1038 = vmatpush.msra.mxu0 0.0
      %1039 = vmatpush.msra.mxu0 %v948
      %1040 = vmatmul.f32.gmra.mxu0 %v617
      %v1041 = vpop.f32.mrf.mxu0
      %v1042 = vadd.f32 %v1001, %v1041
      %1043 = vmatmul.f32.gmra.mxu0 %v620
      %v1044 = vpop.f32.mrf.mxu0
      %v1045 = vadd.f32 %v1004, %v1044
      %1046 = vmatmul.f32.gmra.mxu0 %v623
      %v1047 = vpop.f32.mrf.mxu0
      %v1048 = vadd.f32 %v1007, %v1047
      %1049 = vmatmul.f32.gmra.mxu0 %v626
      %v1050 = vpop.f32.mrf.mxu0
      %v1051 = vadd.f32 %v1010, %v1050
      %1052 = vmatmul.f32.gmra.mxu0 %v629
      %v1053 = vpop.f32.mrf.mxu0
      %v1054 = vadd.f32 %v1013, %v1053
      %1055 = vmatmul.f32.gmra.mxu0 %v632
      %v1056 = vpop.f32.mrf.mxu0
      %v1057 = vadd.f32 %v1016, %v1056
      %1058 = vmatmul.f32.gmra.mxu0 %v635
      %v1059 = vpop.f32.mrf.mxu0
      %v1060 = vadd.f32 %v1019, %v1059
      %1061 = vmatmul.f32.gmra.mxu0 %v638
      %v1062 = vpop.f32.mrf.mxu0
      %v1063 = vadd.f32 %v1022, %v1062
      %1064 = vdwg.mxu0
      %s1065 = scalar_lea.vmem %s3, 48
      %v1066 = vld [vmem:[%s1065] sm:$0xff]
      %1067 = vmatpush.msra.mxu0 0.0
      %1068 = vmatpush.msra.mxu0 0.0
      %1069 = vmatpush.msra.mxu0 0.0
      %1070 = vmatpush.msra.mxu0 0.0
      %1071 = vmatpush.msra.mxu0 0.0
      %1072 = vmatpush.msra.mxu0 0.0
      %1073 = vmatpush.msra.mxu0 0.0
      %1074 = vmatpush.msra.mxu0 0.0
      %1075 = vmatpush.msra.mxu0 0.0
      %1076 = vmatpush.msra.mxu0 0.0
      %1077 = vmatpush.msra.mxu0 0.0
      %1078 = vmatpush.msra.mxu0 0.0
      %1079 = vmatpush.msra.mxu0 0.0
      %1080 = vmatpush.msra.mxu0 0.0
      %1081 = vmatpush.msra.mxu0 0.0
      %1082 = vmatpush.msra.mxu0 %v1066
      %1083 = vmatmul.f32.gmra.mxu0 %v840
      %v1084 = vpop.f32.mrf.mxu0
      %v1085 = vadd.f32 0.0, %v1084
      %1086 = vmatmul.f32.gmra.mxu0 %v843
      %v1087 = vpop.f32.mrf.mxu0
      %v1088 = vadd.f32 0.0, %v1087
      %1089 = vmatmul.f32.gmra.mxu0 %v846
      %v1090 = vpop.f32.mrf.mxu0
      %v1091 = vadd.f32 0.0, %v1090
      %1092 = vmatmul.f32.gmra.mxu0 %v849
      %v1093 = vpop.f32.mrf.mxu0
      %v1094 = vadd.f32 0.0, %v1093
      %1095 = vmatmul.f32.gmra.mxu0 %v852
      %v1096 = vpop.f32.mrf.mxu0
      %v1097 = vadd.f32 0.0, %v1096
      %1098 = vmatmul.f32.gmra.mxu0 %v855
      %v1099 = vpop.f32.mrf.mxu0
      %v1100 = vadd.f32 0.0, %v1099
      %1101 = vmatmul.f32.gmra.mxu0 %v858
      %v1102 = vpop.f32.mrf.mxu0
      %v1103 = vadd.f32 0.0, %v1102
      %1104 = vmatmul.f32.gmra.mxu0 %v861
      %v1105 = vpop.f32.mrf.mxu0
      %v1106 = vadd.f32 0.0, %v1105
      %1107 = vdwg.mxu0
      %v1108 = vadd.f32 %v1042, %v1085
      %v1109 = vadd.f32 %v1045, %v1088
      %v1110 = vadd.f32 %v1048, %v1091
      %v1111 = vadd.f32 %v1051, %v1094
      %v1112 = vadd.f32 %v1054, %v1097
      %v1113 = vadd.f32 %v1057, %v1100
      %v1114 = vadd.f32 %v1060, %v1103
      %v1115 = vadd.f32 %v1063, %v1106
      %v1116 = vld [vmem:[%s588 + $0x2] sm:$0xff]
      %v1117 = vld [vmem:[%s588 + $0x12] sm:$0xff]
      %v1118 = vld [vmem:[%s588 + $0x22] sm:$0xff]
      %v1119 = vld [vmem:[%s588 + $0x32] sm:$0xff]
      %v1120 = vld [vmem:[%s588 + $0x42] sm:$0xff]
      %v1121 = vld [vmem:[%s588 + $0x52] sm:$0xff]
      %v1122 = vld [vmem:[%s588 + $0x62] sm:$0xff]
      %v1123 = vld [vmem:[%s588 + $0x72] sm:$0xff]
      %s1124 = scalar_lea.vmem %s3, 56
      %v1125 = vld [vmem:[%s1124] sm:$0xff]
      %v1127 = vsel %vm566, %v1116, 0
      %v1130 = vsel %vm566, %v1117, 0
      %v1133 = vsel %vm566, %v1118, 0
      %v1136 = vsel %vm566, %v1119, 0
      %v1139 = vsel %vm566, %v1120, 0
      %v1142 = vsel %vm566, %v1121, 0
      %v1145 = vsel %vm566, %v1122, 0
      %v1148 = vsel %vm566, %v1123, 0
      %1150 = vmatpush.msra.mxu0 0.0
      %1151 = vmatpush.msra.mxu0 0.0
      %1152 = vmatpush.msra.mxu0 0.0
      %1153 = vmatpush.msra.mxu0 0.0
      %1154 = vmatpush.msra.mxu0 0.0
      %1155 = vmatpush.msra.mxu0 0.0
      %1156 = vmatpush.msra.mxu0 0.0
      %1157 = vmatpush.msra.mxu0 0.0
      %1158 = vmatpush.msra.mxu0 0.0
      %1159 = vmatpush.msra.mxu0 0.0
      %1160 = vmatpush.msra.mxu0 0.0
      %1161 = vmatpush.msra.mxu0 0.0
      %1162 = vmatpush.msra.mxu0 0.0
      %1163 = vmatpush.msra.mxu0 0.0
      %1164 = vmatpush.msra.mxu0 0.0
      %1165 = vmatpush.msra.mxu0 %v1125
      %1166 = vmatmul.f32.gmra.mxu0 %v1127
      %v1167 = vpop.f32.mrf.mxu0
      %v1168 = vadd.f32 0.0, %v1167
      %1169 = vmatmul.f32.gmra.mxu0 %v1130
      %v1170 = vpop.f32.mrf.mxu0
      %v1171 = vadd.f32 0.0, %v1170
      %1172 = vmatmul.f32.gmra.mxu0 %v1133
      %v1173 = vpop.f32.mrf.mxu0
      %v1174 = vadd.f32 0.0, %v1173
      %1175 = vmatmul.f32.gmra.mxu0 %v1136
      %v1176 = vpop.f32.mrf.mxu0
      %v1177 = vadd.f32 0.0, %v1176
      %1178 = vmatmul.f32.gmra.mxu0 %v1139
      %v1179 = vpop.f32.mrf.mxu0
      %v1180 = vadd.f32 0.0, %v1179
      %1181 = vmatmul.f32.gmra.mxu0 %v1142
      %v1182 = vpop.f32.mrf.mxu0
      %v1183 = vadd.f32 0.0, %v1182
      %1184 = vmatmul.f32.gmra.mxu0 %v1145
      %v1185 = vpop.f32.mrf.mxu0
      %v1186 = vadd.f32 0.0, %v1185
      %1187 = vmatmul.f32.gmra.mxu0 %v1148
      %v1188 = vpop.f32.mrf.mxu0
      %v1189 = vadd.f32 0.0, %v1188
      %1190 = vdwg.mxu0
      %v1191 = vadd.f32 %v1108, %v1168
      %v1192 = vadd.f32 %v1109, %v1171
      %v1193 = vadd.f32 %v1110, %v1174
      %v1194 = vadd.f32 %v1111, %v1177
      %v1195 = vadd.f32 %v1112, %v1180
      %v1196 = vadd.f32 %v1113, %v1183
      %v1197 = vadd.f32 %v1114, %v1186
      %v1198 = vadd.f32 %v1115, %v1189
      %v1199 = vadd.f32 %v1191, %v914
      %v1200 = vadd.f32 %v1192, %v914
      %v1201 = vadd.f32 %v1193, %v914
      %v1202 = vadd.f32 %v1194, %v914
      %v1203 = vadd.f32 %v1195, %v914
      %v1204 = vadd.f32 %v1196, %v914
      %v1205 = vadd.f32 %v1197, %v914
      %v1206 = vadd.f32 %v1198, %v914
      %v1207 = vsel %vm924, %v1199, 0.0
      %v1208 = vsel %vm924, %v1200, 0.0
      %v1209 = vadd.f32 %v1207, %v1208
      %v1210 = vsel %vm924, %v1201, 0.0
      %v1211 = vadd.f32 %v1209, %v1210
      %v1212 = vsel %vm924, %v1202, 0.0
      %v1213 = vadd.f32 %v1211, %v1212
      %v1214 = vsel %vm924, %v1203, 0.0
      %v1215 = vadd.f32 %v1213, %v1214
      %v1216 = vsel %vm924, %v1204, 0.0
      %v1217 = vadd.f32 %v1215, %v1216
      %v1218 = vsel %vm924, %v1205, 0.0
      %v1219 = vadd.f32 %v1217, %v1218
      %v1220 = vsel %vm924, %v1206, 0.0
      %v1221 = vadd.f32 %v1219, %v1220
      %v1222 = vrot.slane %v1221, 4
      %v1223 = vadd.f32 %v1221, %v1222
      %v1224 = vrot.slane %v1223, 2
      %v1225 = vadd.f32 %v1223, %v1224
      %v1226 = vrot.slane %v1225, 1
      %v1227 = vadd.f32 %v1225, %v1226
      %v1228 = vadd.f32 %v946, %v1227
      %s1229 = scalar_lea.vmem %s3, 64
      %v1230 = vld [vmem:[%s1229] sm:$0xff]
      %s1231 = scalar_lea.vmem %s3, 72
      %v1232 = vld [vmem:[%s1231] sm:$0xff]
      %1233 = vmatpush.msra.mxu0 0.0
      %1234 = vmatpush.msra.mxu0 0.0
      %1235 = vmatpush.msra.mxu0 0.0
      %1236 = vmatpush.msra.mxu0 0.0
      %1237 = vmatpush.msra.mxu0 0.0
      %1238 = vmatpush.msra.mxu0 0.0
      %1239 = vmatpush.msra.mxu0 0.0
      %1240 = vmatpush.msra.mxu0 0.0
      %1241 = vmatpush.msra.mxu0 0.0
      %1242 = vmatpush.msra.mxu0 0.0
      %1243 = vmatpush.msra.mxu0 0.0
      %1244 = vmatpush.msra.mxu0 0.0
      %1245 = vmatpush.msra.mxu0 0.0
      %1246 = vmatpush.msra.mxu0 0.0
      %1247 = vmatpush.msra.mxu0 0.0
      %1248 = vmatpush.msra.mxu0 %v1232
      %1249 = vmatmul.f32.gmra.mxu0 %v840
      %v1250 = vpop.f32.mrf.mxu0
      %v1251 = vadd.f32 0.0, %v1250
      %1252 = vmatmul.f32.gmra.mxu0 %v843
      %v1253 = vpop.f32.mrf.mxu0
      %v1254 = vadd.f32 0.0, %v1253
      %1255 = vmatmul.f32.gmra.mxu0 %v846
      %v1256 = vpop.f32.mrf.mxu0
      %v1257 = vadd.f32 0.0, %v1256
      %1258 = vmatmul.f32.gmra.mxu0 %v849
      %v1259 = vpop.f32.mrf.mxu0
      %v1260 = vadd.f32 0.0, %v1259
      %1261 = vmatmul.f32.gmra.mxu0 %v852
      %v1262 = vpop.f32.mrf.mxu0
      %v1263 = vadd.f32 0.0, %v1262
      %1264 = vmatmul.f32.gmra.mxu0 %v855
      %v1265 = vpop.f32.mrf.mxu0
      %v1266 = vadd.f32 0.0, %v1265
      %1267 = vmatmul.f32.gmra.mxu0 %v858
      %v1268 = vpop.f32.mrf.mxu0
      %v1269 = vadd.f32 0.0, %v1268
      %1270 = vmatmul.f32.gmra.mxu0 %v861
      %v1271 = vpop.f32.mrf.mxu0
      %v1272 = vadd.f32 0.0, %v1271
      %1273 = vdwg.mxu0
      %1274 = vmatpush.msra.mxu0 0.0
      %1275 = vmatpush.msra.mxu0 0.0
      %1276 = vmatpush.msra.mxu0 0.0
      %1277 = vmatpush.msra.mxu0 0.0
      %1278 = vmatpush.msra.mxu0 0.0
      %1279 = vmatpush.msra.mxu0 0.0
      %1280 = vmatpush.msra.mxu0 0.0
      %1281 = vmatpush.msra.mxu0 0.0
      %1282 = vmatpush.msra.mxu0 0.0
      %1283 = vmatpush.msra.mxu0 0.0
      %1284 = vmatpush.msra.mxu0 0.0
      %1285 = vmatpush.msra.mxu0 0.0
      %1286 = vmatpush.msra.mxu0 0.0
      %1287 = vmatpush.msra.mxu0 0.0
      %1288 = vmatpush.msra.mxu0 0.0
      %1289 = vmatpush.msra.mxu0 %v1230
      %1290 = vmatmul.f32.gmra.mxu0 %v757
      %v1291 = vpop.f32.mrf.mxu0
      %v1292 = vadd.f32 %v1251, %v1291
      %1293 = vmatmul.f32.gmra.mxu0 %v760
      %v1294 = vpop.f32.mrf.mxu0
      %v1295 = vadd.f32 %v1254, %v1294
      %1296 = vmatmul.f32.gmra.mxu0 %v763
      %v1297 = vpop.f32.mrf.mxu0
      %v1298 = vadd.f32 %v1257, %v1297
      %1299 = vmatmul.f32.gmra.mxu0 %v766
      %v1300 = vpop.f32.mrf.mxu0
      %v1301 = vadd.f32 %v1260, %v1300
      %1302 = vmatmul.f32.gmra.mxu0 %v769
      %v1303 = vpop.f32.mrf.mxu0
      %v1304 = vadd.f32 %v1263, %v1303
      %1305 = vmatmul.f32.gmra.mxu0 %v772
      %v1306 = vpop.f32.mrf.mxu0
      %v1307 = vadd.f32 %v1266, %v1306
      %1308 = vmatmul.f32.gmra.mxu0 %v775
      %v1309 = vpop.f32.mrf.mxu0
      %v1310 = vadd.f32 %v1269, %v1309
      %1311 = vmatmul.f32.gmra.mxu0 %v778
      %v1312 = vpop.f32.mrf.mxu0
      %v1313 = vadd.f32 %v1272, %v1312
      %1314 = vdwg.mxu0
      %s1315 = scalar_lea.vmem [#allocation2], 32
      %v1316 = vld [vmem:[%s1315] sm:$0xff]
      %v1317 = vld [vmem:[%s1315 + $0x10] sm:$0xff]
      %v1318 = vld [vmem:[%s1315 + $0x20] sm:$0xff]
      %v1319 = vld [vmem:[%s1315 + $0x30] sm:$0xff]
      %v1320 = vld [vmem:[%s1315 + $0x40] sm:$0xff]
      %v1321 = vld [vmem:[%s1315 + $0x50] sm:$0xff]
      %v1322 = vld [vmem:[%s1315 + $0x60] sm:$0xff]
      %v1323 = vld [vmem:[%s1315 + $0x70] sm:$0xff]
      %s1324 = scalar_lea.vmem %s3, 80
      %v1325 = vld [vmem:[%s1324] sm:$0xff]
      %v1327 = vsel %vm566, %v1316, 0
      %v1330 = vsel %vm566, %v1317, 0
      %v1333 = vsel %vm566, %v1318, 0
      %v1336 = vsel %vm566, %v1319, 0
      %v1339 = vsel %vm566, %v1320, 0
      %v1342 = vsel %vm566, %v1321, 0
      %v1345 = vsel %vm566, %v1322, 0
      %v1348 = vsel %vm566, %v1323, 0
      %1350 = vmatpush.msra.mxu0 0.0
      %1351 = vmatpush.msra.mxu0 0.0
      %1352 = vmatpush.msra.mxu0 0.0
      %1353 = vmatpush.msra.mxu0 0.0
      %1354 = vmatpush.msra.mxu0 0.0
      %1355 = vmatpush.msra.mxu0 0.0
      %1356 = vmatpush.msra.mxu0 0.0
      %1357 = vmatpush.msra.mxu0 0.0
      %1358 = vmatpush.msra.mxu0 0.0
      %1359 = vmatpush.msra.mxu0 0.0
      %1360 = vmatpush.msra.mxu0 0.0
      %1361 = vmatpush.msra.mxu0 0.0
      %1362 = vmatpush.msra.mxu0 0.0
      %1363 = vmatpush.msra.mxu0 0.0
      %1364 = vmatpush.msra.mxu0 0.0
      %1365 = vmatpush.msra.mxu0 %v1325
      %1366 = vmatmul.f32.gmra.mxu0 %v1327
      %v1367 = vpop.f32.mrf.mxu0
      %v1368 = vadd.f32 0.0, %v1367
      %1369 = vmatmul.f32.gmra.mxu0 %v1330
      %v1370 = vpop.f32.mrf.mxu0
      %v1371 = vadd.f32 0.0, %v1370
      %1372 = vmatmul.f32.gmra.mxu0 %v1333
      %v1373 = vpop.f32.mrf.mxu0
      %v1374 = vadd.f32 0.0, %v1373
      %1375 = vmatmul.f32.gmra.mxu0 %v1336
      %v1376 = vpop.f32.mrf.mxu0
      %v1377 = vadd.f32 0.0, %v1376
      %1378 = vmatmul.f32.gmra.mxu0 %v1339
      %v1379 = vpop.f32.mrf.mxu0
      %v1380 = vadd.f32 0.0, %v1379
      %1381 = vmatmul.f32.gmra.mxu0 %v1342
      %v1382 = vpop.f32.mrf.mxu0
      %v1383 = vadd.f32 0.0, %v1382
      %1384 = vmatmul.f32.gmra.mxu0 %v1345
      %v1385 = vpop.f32.mrf.mxu0
      %v1386 = vadd.f32 0.0, %v1385
      %1387 = vmatmul.f32.gmra.mxu0 %v1348
      %v1388 = vpop.f32.mrf.mxu0
      %v1389 = vadd.f32 0.0, %v1388
      %1390 = vdwg.mxu0
      %v1391 = vadd.f32 %v1292, %v1368
      %v1392 = vadd.f32 %v1295, %v1371
      %v1393 = vadd.f32 %v1298, %v1374
      %v1394 = vadd.f32 %v1301, %v1377
      %v1395 = vadd.f32 %v1304, %v1380
      %v1396 = vadd.f32 %v1307, %v1383
      %v1397 = vadd.f32 %v1310, %v1386
      %v1398 = vadd.f32 %v1313, %v1389
      %v1399 = vld [vmem:[%s1315 + $0x1] sm:$0xff]
      %v1400 = vld [vmem:[%s1315 + $0x11] sm:$0xff]
      %v1401 = vld [vmem:[%s1315 + $0x21] sm:$0xff]
      %v1402 = vld [vmem:[%s1315 + $0x31] sm:$0xff]
      %v1403 = vld [vmem:[%s1315 + $0x41] sm:$0xff]
      %v1404 = vld [vmem:[%s1315 + $0x51] sm:$0xff]
      %v1405 = vld [vmem:[%s1315 + $0x61] sm:$0xff]
      %v1406 = vld [vmem:[%s1315 + $0x71] sm:$0xff]
      %s1407 = scalar_lea.vmem %s3, 88
      %v1408 = vld [vmem:[%s1407] sm:$0xff]
      %v1410 = vsel %vm566, %v1399, 0
      %v1413 = vsel %vm566, %v1400, 0
      %v1416 = vsel %vm566, %v1401, 0
      %v1419 = vsel %vm566, %v1402, 0
      %v1422 = vsel %vm566, %v1403, 0
      %v1425 = vsel %vm566, %v1404, 0
      %v1428 = vsel %vm566, %v1405, 0
      %v1431 = vsel %vm566, %v1406, 0
      %1433 = vmatpush.msra.mxu0 0.0
      %1434 = vmatpush.msra.mxu0 0.0
      %1435 = vmatpush.msra.mxu0 0.0
      %1436 = vmatpush.msra.mxu0 0.0
      %1437 = vmatpush.msra.mxu0 0.0
      %1438 = vmatpush.msra.mxu0 0.0
      %1439 = vmatpush.msra.mxu0 0.0
      %1440 = vmatpush.msra.mxu0 0.0
      %1441 = vmatpush.msra.mxu0 0.0
      %1442 = vmatpush.msra.mxu0 0.0
      %1443 = vmatpush.msra.mxu0 0.0
      %1444 = vmatpush.msra.mxu0 0.0
      %1445 = vmatpush.msra.mxu0 0.0
      %1446 = vmatpush.msra.mxu0 0.0
      %1447 = vmatpush.msra.mxu0 0.0
      %1448 = vmatpush.msra.mxu0 %v1408
      %1449 = vmatmul.f32.gmra.mxu0 %v1410
      %v1450 = vpop.f32.mrf.mxu0
      %v1451 = vadd.f32 0.0, %v1450
      %1452 = vmatmul.f32.gmra.mxu0 %v1413
      %v1453 = vpop.f32.mrf.mxu0
      %v1454 = vadd.f32 0.0, %v1453
      %1455 = vmatmul.f32.gmra.mxu0 %v1416
      %v1456 = vpop.f32.mrf.mxu0
      %v1457 = vadd.f32 0.0, %v1456
      %1458 = vmatmul.f32.gmra.mxu0 %v1419
      %v1459 = vpop.f32.mrf.mxu0
      %v1460 = vadd.f32 0.0, %v1459
      %1461 = vmatmul.f32.gmra.mxu0 %v1422
      %v1462 = vpop.f32.mrf.mxu0
      %v1463 = vadd.f32 0.0, %v1462
      %1464 = vmatmul.f32.gmra.mxu0 %v1425
      %v1465 = vpop.f32.mrf.mxu0
      %v1466 = vadd.f32 0.0, %v1465
      %1467 = vmatmul.f32.gmra.mxu0 %v1428
      %v1468 = vpop.f32.mrf.mxu0
      %v1469 = vadd.f32 0.0, %v1468
      %1470 = vmatmul.f32.gmra.mxu0 %v1431
      %v1471 = vpop.f32.mrf.mxu0
      %v1472 = vadd.f32 0.0, %v1471
      %1473 = vdwg.mxu0
      %v1474 = vadd.f32 %v1391, %v1451
      %v1475 = vadd.f32 %v1392, %v1454
      %v1476 = vadd.f32 %v1393, %v1457
      %v1477 = vadd.f32 %v1394, %v1460
      %v1478 = vadd.f32 %v1395, %v1463
      %v1479 = vadd.f32 %v1396, %v1466
      %v1480 = vadd.f32 %v1397, %v1469
      %v1481 = vadd.f32 %v1398, %v1472
      %v1482 = vadd.f32 %v1474, %v914
      %v1483 = vadd.f32 %v1475, %v914
      %v1484 = vadd.f32 %v1476, %v914
      %v1485 = vadd.f32 %v1477, %v914
      %v1486 = vadd.f32 %v1478, %v914
      %v1487 = vadd.f32 %v1479, %v914
      %v1488 = vadd.f32 %v1480, %v914
      %v1489 = vadd.f32 %v1481, %v914
      %v1490 = vsel %vm924, %v1482, 0.0
      %v1491 = vsel %vm924, %v1483, 0.0
      %v1492 = vadd.f32 %v1490, %v1491
      %v1493 = vsel %vm924, %v1484, 0.0
      %v1494 = vadd.f32 %v1492, %v1493
      %v1495 = vsel %vm924, %v1485, 0.0
      %v1496 = vadd.f32 %v1494, %v1495
      %v1497 = vsel %vm924, %v1486, 0.0
      %v1498 = vadd.f32 %v1496, %v1497
      %v1499 = vsel %vm924, %v1487, 0.0
      %v1500 = vadd.f32 %v1498, %v1499
      %v1501 = vsel %vm924, %v1488, 0.0
      %v1502 = vadd.f32 %v1500, %v1501
      %v1503 = vsel %vm924, %v1489, 0.0
      %v1504 = vadd.f32 %v1502, %v1503
      %v1505 = vrot.slane %v1504, 4
      %v1506 = vadd.f32 %v1504, %v1505
      %v1507 = vrot.slane %v1506, 2
      %v1508 = vadd.f32 %v1506, %v1507
      %v1509 = vrot.slane %v1508, 1
      %v1510 = vadd.f32 %v1508, %v1509
      %v1511 = vadd.f32 %v1228, %v1510
      %s1512 = scalar_lea.vmem %s3, 96
      %v1513 = vld [vmem:[%s1512] sm:$0xff]
      %s1514 = scalar_lea.vmem %s3, 104
      %v1515 = vld [vmem:[%s1514] sm:$0xff]
      %1516 = vmatpush.msra.mxu0 0.0
      %1517 = vmatpush.msra.mxu0 0.0
      %1518 = vmatpush.msra.mxu0 0.0
      %1519 = vmatpush.msra.mxu0 0.0
      %1520 = vmatpush.msra.mxu0 0.0
      %1521 = vmatpush.msra.mxu0 0.0
      %1522 = vmatpush.msra.mxu0 0.0
      %1523 = vmatpush.msra.mxu0 0.0
      %1524 = vmatpush.msra.mxu0 0.0
      %1525 = vmatpush.msra.mxu0 0.0
      %1526 = vmatpush.msra.mxu0 0.0
      %1527 = vmatpush.msra.mxu0 0.0
      %1528 = vmatpush.msra.mxu0 0.0
      %1529 = vmatpush.msra.mxu0 0.0
      %1530 = vmatpush.msra.mxu0 0.0
      %1531 = vmatpush.msra.mxu0 %v1515
      %1532 = vmatmul.f32.gmra.mxu0 %v1127
      %v1533 = vpop.f32.mrf.mxu0
      %v1534 = vadd.f32 0.0, %v1533
      %1535 = vmatmul.f32.gmra.mxu0 %v1130
      %v1536 = vpop.f32.mrf.mxu0
      %v1537 = vadd.f32 0.0, %v1536
      %1538 = vmatmul.f32.gmra.mxu0 %v1133
      %v1539 = vpop.f32.mrf.mxu0
      %v1540 = vadd.f32 0.0, %v1539
      %1541 = vmatmul.f32.gmra.mxu0 %v1136
      %v1542 = vpop.f32.mrf.mxu0
      %v1543 = vadd.f32 0.0, %v1542
      %1544 = vmatmul.f32.gmra.mxu0 %v1139
      %v1545 = vpop.f32.mrf.mxu0
      %v1546 = vadd.f32 0.0, %v1545
      %1547 = vmatmul.f32.gmra.mxu0 %v1142
      %v1548 = vpop.f32.mrf.mxu0
      %v1549 = vadd.f32 0.0, %v1548
      %1550 = vmatmul.f32.gmra.mxu0 %v1145
      %v1551 = vpop.f32.mrf.mxu0
      %v1552 = vadd.f32 0.0, %v1551
      %1553 = vmatmul.f32.gmra.mxu0 %v1148
      %v1554 = vpop.f32.mrf.mxu0
      %v1555 = vadd.f32 0.0, %v1554
      %1556 = vdwg.mxu0
      %1557 = vmatpush.msra.mxu0 0.0
      %1558 = vmatpush.msra.mxu0 0.0
      %1559 = vmatpush.msra.mxu0 0.0
      %1560 = vmatpush.msra.mxu0 0.0
      %1561 = vmatpush.msra.mxu0 0.0
      %1562 = vmatpush.msra.mxu0 0.0
      %1563 = vmatpush.msra.mxu0 0.0
      %1564 = vmatpush.msra.mxu0 0.0
      %1565 = vmatpush.msra.mxu0 0.0
      %1566 = vmatpush.msra.mxu0 0.0
      %1567 = vmatpush.msra.mxu0 0.0
      %1568 = vmatpush.msra.mxu0 0.0
      %1569 = vmatpush.msra.mxu0 0.0
      %1570 = vmatpush.msra.mxu0 0.0
      %1571 = vmatpush.msra.mxu0 0.0
      %1572 = vmatpush.msra.mxu0 %v1513
      %1573 = vmatmul.f32.gmra.mxu0 %v840
      %v1574 = vpop.f32.mrf.mxu0
      %v1575 = vadd.f32 %v1534, %v1574
      %1576 = vmatmul.f32.gmra.mxu0 %v843
      %v1577 = vpop.f32.mrf.mxu0
      %v1578 = vadd.f32 %v1537, %v1577
      %1579 = vmatmul.f32.gmra.mxu0 %v846
      %v1580 = vpop.f32.mrf.mxu0
      %v1581 = vadd.f32 %v1540, %v1580
      %1582 = vmatmul.f32.gmra.mxu0 %v849
      %v1583 = vpop.f32.mrf.mxu0
      %v1584 = vadd.f32 %v1543, %v1583
      %1585 = vmatmul.f32.gmra.mxu0 %v852
      %v1586 = vpop.f32.mrf.mxu0
      %v1587 = vadd.f32 %v1546, %v1586
      %1588 = vmatmul.f32.gmra.mxu0 %v855
      %v1589 = vpop.f32.mrf.mxu0
      %v1590 = vadd.f32 %v1549, %v1589
      %1591 = vmatmul.f32.gmra.mxu0 %v858
      %v1592 = vpop.f32.mrf.mxu0
      %v1593 = vadd.f32 %v1552, %v1592
      %1594 = vmatmul.f32.gmra.mxu0 %v861
      %v1595 = vpop.f32.mrf.mxu0
      %v1596 = vadd.f32 %v1555, %v1595
      %1597 = vdwg.mxu0
      %s1598 = scalar_lea.vmem %s3, 112
      %v1599 = vld [vmem:[%s1598] sm:$0xff]
      %1600 = vmatpush.msra.mxu0 0.0
      %1601 = vmatpush.msra.mxu0 0.0
      %1602 = vmatpush.msra.mxu0 0.0
      %1603 = vmatpush.msra.mxu0 0.0
      %1604 = vmatpush.msra.mxu0 0.0
      %1605 = vmatpush.msra.mxu0 0.0
      %1606 = vmatpush.msra.mxu0 0.0
      %1607 = vmatpush.msra.mxu0 0.0
      %1608 = vmatpush.msra.mxu0 0.0
      %1609 = vmatpush.msra.mxu0 0.0
      %1610 = vmatpush.msra.mxu0 0.0
      %1611 = vmatpush.msra.mxu0 0.0
      %1612 = vmatpush.msra.mxu0 0.0
      %1613 = vmatpush.msra.mxu0 0.0
      %1614 = vmatpush.msra.mxu0 0.0
      %1615 = vmatpush.msra.mxu0 %v1599
      %1616 = vmatmul.f32.gmra.mxu0 %v1410
      %v1617 = vpop.f32.mrf.mxu0
      %v1618 = vadd.f32 0.0, %v1617
      %1619 = vmatmul.f32.gmra.mxu0 %v1413
      %v1620 = vpop.f32.mrf.mxu0
      %v1621 = vadd.f32 0.0, %v1620
      %1622 = vmatmul.f32.gmra.mxu0 %v1416
      %v1623 = vpop.f32.mrf.mxu0
      %v1624 = vadd.f32 0.0, %v1623
      %1625 = vmatmul.f32.gmra.mxu0 %v1419
      %v1626 = vpop.f32.mrf.mxu0
      %v1627 = vadd.f32 0.0, %v1626
      %1628 = vmatmul.f32.gmra.mxu0 %v1422
      %v1629 = vpop.f32.mrf.mxu0
      %v1630 = vadd.f32 0.0, %v1629
      %1631 = vmatmul.f32.gmra.mxu0 %v1425
      %v1632 = vpop.f32.mrf.mxu0
      %v1633 = vadd.f32 0.0, %v1632
      %1634 = vmatmul.f32.gmra.mxu0 %v1428
      %v1635 = vpop.f32.mrf.mxu0
      %v1636 = vadd.f32 0.0, %v1635
      %1637 = vmatmul.f32.gmra.mxu0 %v1431
      %v1638 = vpop.f32.mrf.mxu0
      %v1639 = vadd.f32 0.0, %v1638
      %1640 = vdwg.mxu0
      %v1641 = vadd.f32 %v1575, %v1618
      %v1642 = vadd.f32 %v1578, %v1621
      %v1643 = vadd.f32 %v1581, %v1624
      %v1644 = vadd.f32 %v1584, %v1627
      %v1645 = vadd.f32 %v1587, %v1630
      %v1646 = vadd.f32 %v1590, %v1633
      %v1647 = vadd.f32 %v1593, %v1636
      %v1648 = vadd.f32 %v1596, %v1639
      %v1649 = vld [vmem:[%s1315 + $0x2] sm:$0xff]
      %v1650 = vld [vmem:[%s1315 + $0x12] sm:$0xff]
      %v1651 = vld [vmem:[%s1315 + $0x22] sm:$0xff]
      %v1652 = vld [vmem:[%s1315 + $0x32] sm:$0xff]
      %v1653 = vld [vmem:[%s1315 + $0x42] sm:$0xff]
      %v1654 = vld [vmem:[%s1315 + $0x52] sm:$0xff]
      %v1655 = vld [vmem:[%s1315 + $0x62] sm:$0xff]
      %v1656 = vld [vmem:[%s1315 + $0x72] sm:$0xff]
      %s1657 = scalar_lea.vmem %s3, 120
      %v1658 = vld [vmem:[%s1657] sm:$0xff]
      %v1660 = vsel %vm566, %v1649, 0
      %v1663 = vsel %vm566, %v1650, 0
      %v1666 = vsel %vm566, %v1651, 0
      %v1669 = vsel %vm566, %v1652, 0
      %v1672 = vsel %vm566, %v1653, 0
      %v1675 = vsel %vm566, %v1654, 0
      %v1678 = vsel %vm566, %v1655, 0
      %v1681 = vsel %vm566, %v1656, 0
      %1683 = vmatpush.msra.mxu0 0.0
      %1684 = vmatpush.msra.mxu0 0.0
      %1685 = vmatpush.msra.mxu0 0.0
      %1686 = vmatpush.msra.mxu0 0.0
      %1687 = vmatpush.msra.mxu0 0.0
      %1688 = vmatpush.msra.mxu0 0.0
      %1689 = vmatpush.msra.mxu0 0.0
      %1690 = vmatpush.msra.mxu0 0.0
      %1691 = vmatpush.msra.mxu0 0.0
      %1692 = vmatpush.msra.mxu0 0.0
      %1693 = vmatpush.msra.mxu0 0.0
      %1694 = vmatpush.msra.mxu0 0.0
      %1695 = vmatpush.msra.mxu0 0.0
      %1696 = vmatpush.msra.mxu0 0.0
      %1697 = vmatpush.msra.mxu0 0.0
      %1698 = vmatpush.msra.mxu0 %v1658
      %1699 = vmatmul.f32.gmra.mxu0 %v1660
      %v1700 = vpop.f32.mrf.mxu0
      %v1701 = vadd.f32 0.0, %v1700
      %1702 = vmatmul.f32.gmra.mxu0 %v1663
      %v1703 = vpop.f32.mrf.mxu0
      %v1704 = vadd.f32 0.0, %v1703
      %1705 = vmatmul.f32.gmra.mxu0 %v1666
      %v1706 = vpop.f32.mrf.mxu0
      %v1707 = vadd.f32 0.0, %v1706
      %1708 = vmatmul.f32.gmra.mxu0 %v1669
      %v1709 = vpop.f32.mrf.mxu0
      %v1710 = vadd.f32 0.0, %v1709
      %1711 = vmatmul.f32.gmra.mxu0 %v1672
      %v1712 = vpop.f32.mrf.mxu0
      %v1713 = vadd.f32 0.0, %v1712
      %1714 = vmatmul.f32.gmra.mxu0 %v1675
      %v1715 = vpop.f32.mrf.mxu0
      %v1716 = vadd.f32 0.0, %v1715
      %1717 = vmatmul.f32.gmra.mxu0 %v1678
      %v1718 = vpop.f32.mrf.mxu0
      %v1719 = vadd.f32 0.0, %v1718
      %1720 = vmatmul.f32.gmra.mxu0 %v1681
      %v1721 = vpop.f32.mrf.mxu0
      %v1722 = vadd.f32 0.0, %v1721
      %1723 = vdwg.mxu0
      %v1724 = vadd.f32 %v1641, %v1701
      %v1725 = vadd.f32 %v1642, %v1704
      %v1726 = vadd.f32 %v1643, %v1707
      %v1727 = vadd.f32 %v1644, %v1710
      %v1728 = vadd.f32 %v1645, %v1713
      %v1729 = vadd.f32 %v1646, %v1716
      %v1730 = vadd.f32 %v1647, %v1719
      %v1731 = vadd.f32 %v1648, %v1722
      %v1732 = vadd.f32 %v1724, %v914
      %v1733 = vadd.f32 %v1725, %v914
      %v1734 = vadd.f32 %v1726, %v914
      %v1735 = vadd.f32 %v1727, %v914
      %v1736 = vadd.f32 %v1728, %v914
      %v1737 = vadd.f32 %v1729, %v914
      %v1738 = vadd.f32 %v1730, %v914
      %v1739 = vadd.f32 %v1731, %v914
      %v1740 = vsel %vm924, %v1732, 0.0
      %v1741 = vsel %vm924, %v1733, 0.0
      %v1742 = vadd.f32 %v1740, %v1741
      %v1743 = vsel %vm924, %v1734, 0.0
      %v1744 = vadd.f32 %v1742, %v1743
      %v1745 = vsel %vm924, %v1735, 0.0
      %v1746 = vadd.f32 %v1744, %v1745
      %v1747 = vsel %vm924, %v1736, 0.0
      %v1748 = vadd.f32 %v1746, %v1747
      %v1749 = vsel %vm924, %v1737, 0.0
      %v1750 = vadd.f32 %v1748, %v1749
      %v1751 = vsel %vm924, %v1738, 0.0
      %v1752 = vadd.f32 %v1750, %v1751
      %v1753 = vsel %vm924, %v1739, 0.0
      %v1754 = vadd.f32 %v1752, %v1753
      %v1755 = vrot.slane %v1754, 4
      %v1756 = vadd.f32 %v1754, %v1755
      %v1757 = vrot.slane %v1756, 2
      %v1758 = vadd.f32 %v1756, %v1757
      %v1759 = vrot.slane %v1758, 1
      %v1760 = vadd.f32 %v1758, %v1759
      %v1761 = vadd.f32 %v1511, %v1760
      %v1762 = vrcp.pop 256.0
      %v1763 = vmul.f32 256.0, %v1762
      %v1764 = vsub.f32 1.0, %v1763
      %v1765 = vmul.f32 %v1762, %v1764
      %v1766 = vadd.f32 %v1762, %v1765
      %vm1767 = vweird.f32 %v1762
      %v1768 = vsel %vm1767, %v1762, %v1766
      %v1769 = vmul.f32 %v1761, %v1768
      %v1770 = vsub.f32 %v916, %v1769
      %v1771 = vsub.f32 %v917, %v1769
      %v1772 = vsub.f32 %v918, %v1769
      %v1773 = vsub.f32 %v919, %v1769
      %v1774 = vsub.f32 %v920, %v1769
      %v1775 = vsub.f32 %v921, %v1769
      %v1776 = vsub.f32 %v922, %v1769
      %v1777 = vsub.f32 %v923, %v1769
      %v1778 = vmul.f32 %v1770, %v1770
      %v1779 = vmul.f32 %v1771, %v1771
      %v1780 = vmul.f32 %v1772, %v1772
      %v1781 = vmul.f32 %v1773, %v1773
      %v1782 = vmul.f32 %v1774, %v1774
      %v1783 = vmul.f32 %v1775, %v1775
      %v1784 = vmul.f32 %v1776, %v1776
      %v1785 = vmul.f32 %v1777, %v1777
      %v1786 = vsel %vm924, %v1778, 0.0
      %v1787 = vsel %vm924, %v1779, 0.0
      %v1788 = vadd.f32 %v1786, %v1787
      %v1789 = vsel %vm924, %v1780, 0.0
      %v1790 = vadd.f32 %v1788, %v1789
      %v1791 = vsel %vm924, %v1781, 0.0
      %v1792 = vadd.f32 %v1790, %v1791
      %v1793 = vsel %vm924, %v1782, 0.0
      %v1794 = vadd.f32 %v1792, %v1793
      %v1795 = vsel %vm924, %v1783, 0.0
      %v1796 = vadd.f32 %v1794, %v1795
      %v1797 = vsel %vm924, %v1784, 0.0
      %v1798 = vadd.f32 %v1796, %v1797
      %v1799 = vsel %vm924, %v1785, 0.0
      %v1800 = vadd.f32 %v1798, %v1799
      %v1801 = vrot.slane %v1800, 4
      %v1802 = vadd.f32 %v1800, %v1801
      %v1803 = vrot.slane %v1802, 2
      %v1804 = vadd.f32 %v1802, %v1803
      %v1805 = vrot.slane %v1804, 1
      %v1806 = vadd.f32 %v1804, %v1805
      %v1807 = vadd.f32 %v1806, 0.0
      %v1808 = vsub.f32 %v1199, %v1769
      %v1809 = vsub.f32 %v1200, %v1769
      %v1810 = vsub.f32 %v1201, %v1769
      %v1811 = vsub.f32 %v1202, %v1769
      %v1812 = vsub.f32 %v1203, %v1769
      %v1813 = vsub.f32 %v1204, %v1769
      %v1814 = vsub.f32 %v1205, %v1769
      %v1815 = vsub.f32 %v1206, %v1769
      %v1816 = vmul.f32 %v1808, %v1808
      %v1817 = vmul.f32 %v1809, %v1809
      %v1818 = vmul.f32 %v1810, %v1810
      %v1819 = vmul.f32 %v1811, %v1811
      %v1820 = vmul.f32 %v1812, %v1812
      %v1821 = vmul.f32 %v1813, %v1813
      %v1822 = vmul.f32 %v1814, %v1814
      %v1823 = vmul.f32 %v1815, %v1815
      %v1824 = vsel %vm924, %v1816, 0.0
      %v1825 = vsel %vm924, %v1817, 0.0
      %v1826 = vadd.f32 %v1824, %v1825
      %v1827 = vsel %vm924, %v1818, 0.0
      %v1828 = vadd.f32 %v1826, %v1827
      %v1829 = vsel %vm924, %v1819, 0.0
      %v1830 = vadd.f32 %v1828, %v1829
      %v1831 = vsel %vm924, %v1820, 0.0
      %v1832 = vadd.f32 %v1830, %v1831
      %v1833 = vsel %vm924, %v1821, 0.0
      %v1834 = vadd.f32 %v1832, %v1833
      %v1835 = vsel %vm924, %v1822, 0.0
      %v1836 = vadd.f32 %v1834, %v1835
      %v1837 = vsel %vm924, %v1823, 0.0
      %v1838 = vadd.f32 %v1836, %v1837
      %v1839 = vrot.slane %v1838, 4
      %v1840 = vadd.f32 %v1838, %v1839
      %v1841 = vrot.slane %v1840, 2
      %v1842 = vadd.f32 %v1840, %v1841
      %v1843 = vrot.slane %v1842, 1
      %v1844 = vadd.f32 %v1842, %v1843
      %v1845 = vadd.f32 %v1807, %v1844
      %v1846 = vsub.f32 %v1482, %v1769
      %v1847 = vsub.f32 %v1483, %v1769
      %v1848 = vsub.f32 %v1484, %v1769
      %v1849 = vsub.f32 %v1485, %v1769
      %v1850 = vsub.f32 %v1486, %v1769
      %v1851 = vsub.f32 %v1487, %v1769
      %v1852 = vsub.f32 %v1488, %v1769
      %v1853 = vsub.f32 %v1489, %v1769
      %v1854 = vmul.f32 %v1846, %v1846
      %v1855 = vmul.f32 %v1847, %v1847
      %v1856 = vmul.f32 %v1848, %v1848
      %v1857 = vmul.f32 %v1849, %v1849
      %v1858 = vmul.f32 %v1850, %v1850
      %v1859 = vmul.f32 %v1851, %v1851
      %v1860 = vmul.f32 %v1852, %v1852
      %v1861 = vmul.f32 %v1853, %v1853
      %v1862 = vsel %vm924, %v1854, 0.0
      %v1863 = vsel %vm924, %v1855, 0.0
      %v1864 = vadd.f32 %v1862, %v1863
      %v1865 = vsel %vm924, %v1856, 0.0
      %v1866 = vadd.f32 %v1864, %v1865
      %v1867 = vsel %vm924, %v1857, 0.0
      %v1868 = vadd.f32 %v1866, %v1867
      %v1869 = vsel %vm924, %v1858, 0.0
      %v1870 = vadd.f32 %v1868, %v1869
      %v1871 = vsel %vm924, %v1859, 0.0
      %v1872 = vadd.f32 %v1870, %v1871
      %v1873 = vsel %vm924, %v1860, 0.0
      %v1874 = vadd.f32 %v1872, %v1873
      %v1875 = vsel %vm924, %v1861, 0.0
      %v1876 = vadd.f32 %v1874, %v1875
      %v1877 = vrot.slane %v1876, 4
      %v1878 = vadd.f32 %v1876, %v1877
      %v1879 = vrot.slane %v1878, 2
      %v1880 = vadd.f32 %v1878, %v1879
      %v1881 = vrot.slane %v1880, 1
      %v1882 = vadd.f32 %v1880, %v1881
      %v1883 = vadd.f32 %v1845, %v1882
      %v1884 = vsub.f32 %v1732, %v1769
      %v1885 = vsub.f32 %v1733, %v1769
      %v1886 = vsub.f32 %v1734, %v1769
      %v1887 = vsub.f32 %v1735, %v1769
      %v1888 = vsub.f32 %v1736, %v1769
      %v1889 = vsub.f32 %v1737, %v1769
      %v1890 = vsub.f32 %v1738, %v1769
      %v1891 = vsub.f32 %v1739, %v1769
      %v1892 = vmul.f32 %v1884, %v1884
      %v1893 = vmul.f32 %v1885, %v1885
      %v1894 = vmul.f32 %v1886, %v1886
      %v1895 = vmul.f32 %v1887, %v1887
      %v1896 = vmul.f32 %v1888, %v1888
      %v1897 = vmul.f32 %v1889, %v1889
      %v1898 = vmul.f32 %v1890, %v1890
      %v1899 = vmul.f32 %v1891, %v1891
      %v1900 = vsel %vm924, %v1892, 0.0
      %v1901 = vsel %vm924, %v1893, 0.0
      %v1902 = vadd.f32 %v1900, %v1901
      %v1903 = vsel %vm924, %v1894, 0.0
      %v1904 = vadd.f32 %v1902, %v1903
      %v1905 = vsel %vm924, %v1895, 0.0
      %v1906 = vadd.f32 %v1904, %v1905
      %v1907 = vsel %vm924, %v1896, 0.0
      %v1908 = vadd.f32 %v1906, %v1907
      %v1909 = vsel %vm924, %v1897, 0.0
      %v1910 = vadd.f32 %v1908, %v1909
      %v1911 = vsel %vm924, %v1898, 0.0
      %v1912 = vadd.f32 %v1910, %v1911
      %v1913 = vsel %vm924, %v1899, 0.0
      %v1914 = vadd.f32 %v1912, %v1913
      %v1915 = vrot.slane %v1914, 4
      %v1916 = vadd.f32 %v1914, %v1915
      %v1917 = vrot.slane %v1916, 2
      %v1918 = vadd.f32 %v1916, %v1917
      %v1919 = vrot.slane %v1918, 1
      %v1920 = vadd.f32 %v1918, %v1919
      %v1921 = vadd.f32 %v1883, %v1920
      %v1922 = vmul.f32 %v1921, %v1768
      %v1923 = vadd.f32 %v1922, 1e-05
      %v1924 = vrsqrt.pop %v1923
      %v1925 = vmul.f32 %v1924, %v1923
      %v1926 = vmul.f32 %v1925, %v1924
      %v1927 = vmul.f32 0.5, %v1926
      %v1928 = vsub.f32 1.5, %v1927
      %v1929 = vmul.f32 %v1924, %v1928
      %vm1930 = vweird.f32 %v1923
      %vm1931 = vweird.f32 %v1924
      %vm1932 = vmor %vm1930, %vm1931
      %v1933 = vsel %vm1932, %v1924, %v1929
      %v1934 = vmul.f32 %v1770, %v1933
      %v1935 = vmul.f32 %v1771, %v1933
      %v1936 = vmul.f32 %v1772, %v1933
      %v1937 = vmul.f32 %v1773, %v1933
      %v1938 = vmul.f32 %v1774, %v1933
      %v1939 = vmul.f32 %v1775, %v1933
      %v1940 = vmul.f32 %v1776, %v1933
      %v1941 = vmul.f32 %v1777, %v1933
      %v1942 = vmax.f32 %v1934, 0.0
      %v1943 = vmax.f32 %v1935, 0.0
      %v1944 = vmax.f32 %v1936, 0.0
      %v1945 = vmax.f32 %v1937, 0.0
      %v1946 = vmax.f32 %v1938, 0.0
      %v1947 = vmax.f32 %v1939, 0.0
      %v1948 = vmax.f32 %v1940, 0.0
      %v1949 = vmax.f32 %v1941, 0.0
      %1950 = vst.msk [vmem:[%s224] sm:$0xff] %vm924, %v1942
      %1951 = vst.msk [vmem:[%s224 + $0x8] sm:$0xff] %vm924, %v1943
      %1952 = vst.msk [vmem:[%s224 + $0x10] sm:$0xff] %vm924, %v1944
      %1953 = vst.msk [vmem:[%s224 + $0x18] sm:$0xff] %vm924, %v1945
      %1954 = vst.msk [vmem:[%s224 + $0x20] sm:$0xff] %vm924, %v1946
      %1955 = vst.msk [vmem:[%s224 + $0x28] sm:$0xff] %vm924, %v1947
      %1956 = vst.msk [vmem:[%s224 + $0x30] sm:$0xff] %vm924, %v1948
      %1957 = vst.msk [vmem:[%s224 + $0x38] sm:$0xff] %vm924, %v1949
      %v1958 = vmul.f32 %v1808, %v1933
      %v1959 = vmul.f32 %v1809, %v1933
      %v1960 = vmul.f32 %v1810, %v1933
      %v1961 = vmul.f32 %v1811, %v1933
      %v1962 = vmul.f32 %v1812, %v1933
      %v1963 = vmul.f32 %v1813, %v1933
      %v1964 = vmul.f32 %v1814, %v1933
      %v1965 = vmul.f32 %v1815, %v1933
      %v1966 = vmax.f32 %v1958, 0.0
      %v1967 = vmax.f32 %v1959, 0.0
      %v1968 = vmax.f32 %v1960, 0.0
      %v1969 = vmax.f32 %v1961, 0.0
      %v1970 = vmax.f32 %v1962, 0.0
      %v1971 = vmax.f32 %v1963, 0.0
      %v1972 = vmax.f32 %v1964, 0.0
      %v1973 = vmax.f32 %v1965, 0.0
      %1974 = vst.msk [vmem:[%s224 + $0x40] sm:$0xff] %vm924, %v1966
      %1975 = vst.msk [vmem:[%s224 + $0x48] sm:$0xff] %vm924, %v1967
      %1976 = vst.msk [vmem:[%s224 + $0x50] sm:$0xff] %vm924, %v1968
      %1977 = vst.msk [vmem:[%s224 + $0x58] sm:$0xff] %vm924, %v1969
      %1978 = vst.msk [vmem:[%s224 + $0x60] sm:$0xff] %vm924, %v1970
      %1979 = vst.msk [vmem:[%s224 + $0x68] sm:$0xff] %vm924, %v1971
      %1980 = vst.msk [vmem:[%s224 + $0x70] sm:$0xff] %vm924, %v1972
      %1981 = vst.msk [vmem:[%s224 + $0x78] sm:$0xff] %vm924, %v1973
      %v1982 = vmul.f32 %v1846, %v1933
      %v1983 = vmul.f32 %v1847, %v1933
      %v1984 = vmul.f32 %v1848, %v1933
      %v1985 = vmul.f32 %v1849, %v1933
      %v1986 = vmul.f32 %v1850, %v1933
      %v1987 = vmul.f32 %v1851, %v1933
      %v1988 = vmul.f32 %v1852, %v1933
      %v1989 = vmul.f32 %v1853, %v1933
      %v1990 = vmax.f32 %v1982, 0.0
      %v1991 = vmax.f32 %v1983, 0.0
      %v1992 = vmax.f32 %v1984, 0.0
      %v1993 = vmax.f32 %v1985, 0.0
      %v1994 = vmax.f32 %v1986, 0.0
      %v1995 = vmax.f32 %v1987, 0.0
      %v1996 = vmax.f32 %v1988, 0.0
      %v1997 = vmax.f32 %v1989, 0.0
      %1998 = vst.msk [vmem:[%s224 + $0x80] sm:$0xff] %vm924, %v1990
      %1999 = vst.msk [vmem:[%s224 + $0x88] sm:$0xff] %vm924, %v1991
      %2000 = vst.msk [vmem:[%s224 + $0x90] sm:$0xff] %vm924, %v1992
      %2001 = vst.msk [vmem:[%s224 + $0x98] sm:$0xff] %vm924, %v1993
      %2002 = vst.msk [vmem:[%s224 + $0xa0] sm:$0xff] %vm924, %v1994
      %2003 = vst.msk [vmem:[%s224 + $0xa8] sm:$0xff] %vm924, %v1995
      %2004 = vst.msk [vmem:[%s224 + $0xb0] sm:$0xff] %vm924, %v1996
      %2005 = vst.msk [vmem:[%s224 + $0xb8] sm:$0xff] %vm924, %v1997
      %v2006 = vmul.f32 %v1884, %v1933
      %v2007 = vmul.f32 %v1885, %v1933
      %v2008 = vmul.f32 %v1886, %v1933
      %v2009 = vmul.f32 %v1887, %v1933
      %v2010 = vmul.f32 %v1888, %v1933
      %v2011 = vmul.f32 %v1889, %v1933
      %v2012 = vmul.f32 %v1890, %v1933
      %v2013 = vmul.f32 %v1891, %v1933
      %v2014 = vmax.f32 %v2006, 0.0
      %v2015 = vmax.f32 %v2007, 0.0
      %v2016 = vmax.f32 %v2008, 0.0
      %v2017 = vmax.f32 %v2009, 0.0
      %v2018 = vmax.f32 %v2010, 0.0
      %v2019 = vmax.f32 %v2011, 0.0
      %v2020 = vmax.f32 %v2012, 0.0
      %v2021 = vmax.f32 %v2013, 0.0
      %2022 = vst.msk [vmem:[%s224 + $0xc0] sm:$0xff] %vm924, %v2014
      %2023 = vst.msk [vmem:[%s224 + $0xc8] sm:$0xff] %vm924, %v2015
      %2024 = vst.msk [vmem:[%s224 + $0xd0] sm:$0xff] %vm924, %v2016
      %2025 = vst.msk [vmem:[%s224 + $0xd8] sm:$0xff] %vm924, %v2017
      %2026 = vst.msk [vmem:[%s224 + $0xe0] sm:$0xff] %vm924, %v2018
      %2027 = vst.msk [vmem:[%s224 + $0xe8] sm:$0xff] %vm924, %v2019
      %2028 = vst.msk [vmem:[%s224 + $0xf0] sm:$0xff] %vm924, %v2020
      %2029 = vst.msk [vmem:[%s224 + $0xf8] sm:$0xff] %vm924, %v2021
      %p2030 = scmp.lt.s32.totalorder %s16, 1
      %s2031 = scalar_select %p2030, %s16, 1
      %s2032 = smul.addr %s2031, 32
      %s2033 = smul.addr %s2032, 8
      %s2034 = scalar_lea.vmem %s5, %s2033
      // Predicated region
      $region41: #{unet_block_innermost.1} parent=39 // pred_check
        %p2035 = pneg %p144
      $region42: #{unet_block_innermost.1} parent=39 // pred_check_branch
        %2037 = sbr.rel (%p2035) target = $region44
      $region43: #{unet_block_innermost.1} parent=39 // pred_region
        _
      $region44: #{unet_block_innermost.1} parent=39 // pred_fallthru
        _
    $region40: #{unet_block_innermost.1} parent=5 // pred_fallthru
      _
    %p2038 = scmp.le.s32.totalorder 2, %s11
    // Predicated region
    $region45: #{unet_block_innermost.1} parent=5 // pred_check
      %p2039 = pneg %p2038
    $region46: #{unet_block_innermost.1} parent=5 // pred_check_branch
      %2041 = sbr.rel (%p2039) target = $region48
    $region47: #{unet_block_innermost.1} parent=5 // pred_region
      %s2042 = ssub.s32 %s11, 2
      // Predicated region
      $region49: #{unet_block_innermost.1} parent=47 // pred_check
        %p2043 = pneg %p150
      $region50: #{unet_block_innermost.1} parent=47 // pred_check_branch
        %2045 = sbr.rel (%p2043) target = $region52
      $region51: #{unet_block_innermost.1} parent=47 // pred_region
        %p2046 = scmp.lt.s32.totalorder %s17, 1
        %s2047 = scalar_select %p2046, %s17, 1
        %s2048 = smul.addr %s2047, 32
        %s2049 = smul.addr %s2048, 8
        %s2050 = scalar_lea.vmem %s5, %s2049
      $region52: #{unet_block_innermost.1} parent=47 // pred_fallthru
        _
    $region48: #{unet_block_innermost.1} parent=5 // pred_fallthru
      _
  $region6: #{unet_block_innermost.1} parent=0 // loop_footer
    %s15 = sadd.s32 1, %s11
  $region7: #{unet_block_innermost.1} parent=0 // loop_footer_branch
    %10 = sbr.rel target = $region3
  $region8: #{unet_block_innermost.1} parent=0 // loop_exit
    _

</llo_original>
